<compile_context>
chip_gen: v5e
topology: v5e:2x2
jax: 0.10.0
libtpu: 0.0.40
codegen_flags: <defaults>
</compile_context>

<pallas_src>
import functools
import math

import jax
import jax.numpy as jnp
from jax.experimental import pallas as pl

# ----------------------- small synthetic config ------------------------------
B, S, H = 2, 8, 32          # batch, seq, hidden_size
N_HEADS, D_HEAD = 2, 16     # H = N_HEADS * D_HEAD
INTERMEDIATE = 64           # FFN inner dim (4 * H)
N_LAYERS = 2
VOCAB = 30
MAX_POS = 16
TYPE_VOCAB = 2
NUM_LABELS = 5              # SST: 5 sentiment classes
LOGITS_PAD = 128            # lane-dense padded classifier output width
LN_EPS = 1e-12

assert H == N_HEADS * D_HEAD


# ------------------------------ fused Pallas kernel ---------------------------
def _fused_bert_kernel(
    emb_ref, mask_ref, emb_g_ref, emb_b_ref,
    wqkv_ref, bqkv_ref, wo_ref, bo_ref, ln1_g_ref, ln1_b_ref,
    wi_ref, bi_ref, wd_ref, bd_ref, ln2_g_ref, ln2_b_ref,
    wp_ref, bp_ref, wproj_ref, bproj_ref,
    logits_ref,
    *, batch, seq, n_layers):

    def layernorm(x, g, b):
        mu = jnp.mean(x, axis=-1, keepdims=True)
        xc = x - mu
        var = jnp.mean(xc * xc, axis=-1, keepdims=True)
        return xc * jax.lax.rsqrt(var + LN_EPS) * g + b

    def gelu(y):
        # TODO(synk): tanh-approx GELU (BERT); torch F.gelu default is exact erf.
        return 0.5 * y * (1.0 + jnp.tanh(0.7978845608028654 *
                                         (y + 0.044715 * y * y * y)))

    # additive attention mask, built once and hoisted: (B, 1, S)
    add_mask = ((1.0 - mask_ref[...]) * -10000.0)[:, None, :]

    # embedding LayerNorm (dropout = identity at inference)
    x = layernorm(emb_ref[...], emb_g_ref[...], emb_b_ref[...])      # (B*S, H)

    for l in range(n_layers):                                        # static unroll
        # ---- fused QKV projection: one MXU pass, K=H, N=3H ----
        qkv = jnp.dot(x, wqkv_ref[l],
                      preferred_element_type=jnp.float32) + bqkv_ref[l]

        # ---- attention: all batch elements per head in one batched einsum ----
        ctx_heads = []
        for h in range(N_HEADS):                                     # static unroll
            c0 = h * D_HEAD
            # 1/sqrt(d_head) is pre-folded into the Q block of Wqkv.
            qh = qkv[:, c0:c0 + D_HEAD].reshape(batch, seq, D_HEAD)
            kh = qkv[:, H + c0:H + c0 + D_HEAD].reshape(batch, seq, D_HEAD)
            vh = qkv[:, 2 * H + c0:2 * H + c0 + D_HEAD].reshape(batch, seq, D_HEAD)

            s = jnp.einsum("bqd,bkd->bqk", qh, kh,
                           preferred_element_type=jnp.float32) + add_mask
            s = s - jnp.max(s, axis=-1, keepdims=True)
            p = jnp.exp(s)
            p = p * pl.reciprocal(jnp.sum(p, axis=-1, keepdims=True), approx=True)
            ctx_h = jnp.einsum("bqk,bkd->bqd", p, vh,
                               preferred_element_type=jnp.float32)
            ctx_heads.append(ctx_h.reshape(batch * seq, D_HEAD))
        ctx = jnp.concatenate(ctx_heads, axis=-1)                    # (B*S, H)

        # ---- output projection + residual + LayerNorm (fused epilogue) ----
        attn_out = layernorm(
            x + jnp.dot(ctx, wo_ref[l],
                        preferred_element_type=jnp.float32) + bo_ref[l],
            ln1_g_ref[l], ln1_b_ref[l])

        # ---- FFN (gelu) + residual + LayerNorm (fused epilogue) ----
        ff = gelu(jnp.dot(attn_out, wi_ref[l],
                          preferred_element_type=jnp.float32) + bi_ref[l])
        x = layernorm(
            attn_out + jnp.dot(ff, wd_ref[l],
                               preferred_element_type=jnp.float32) + bd_ref[l],
            ln2_g_ref[l], ln2_b_ref[l])

    # ---- pooler (first token, tanh) + classifier projection ----
    first_tok = jnp.concatenate(
        [x[b * seq:b * seq + 1, :] for b in range(batch)], axis=0)   # (B, H)
    pooled = jnp.tanh(jnp.dot(first_tok, wp_ref[...],
                              preferred_element_type=jnp.float32) + bp_ref[...])
    # pooler_dropout: identity at inference
    logits_ref[...] = jnp.dot(pooled, wproj_ref[...],
                              preferred_element_type=jnp.float32) + bproj_ref[...]


# ------------------------------ model (glue) ----------------------------------
def bert_sentiment_forward(params, input_ids, attention_mask):
    Bsz, Seq = input_ids.shape
    # Embedding lookups (word + position + token_type=0) stay in plain XLA; the
    # tiny gather has no useful Pallas equivalent at this size.
    emb = (params["word_emb"][input_ids]
           + params["pos_emb"][:Seq][None, :, :]
           + params["type_emb"][0][None, None, :]).reshape(Bsz * Seq, H)
    mask_f = attention_mask.astype(jnp.float32)

    kernel = functools.partial(
        _fused_bert_kernel, batch=Bsz, seq=Seq,
        n_layers=params["Wqkv"].shape[0])

    logits_pad = pl.pallas_call(
        kernel,
        out_shape=jax.ShapeDtypeStruct((Bsz, LOGITS_PAD), jnp.float32),
    )(emb, mask_f,
      params["emb_ln_g"], params["emb_ln_b"],
      params["Wqkv"], params["bqkv"], params["Wo"], params["bo"],
      params["ln1_g"], params["ln1_b"],
      params["Wi"], params["bi"], params["Wd"], params["bd"],
      params["ln2_g"], params["ln2_b"],
      params["Wp"], params["bp"], params["Wproj"], params["bproj"])

    # slice the lane-padded classifier output back to the 5 sentiment classes
    return logits_pad[:, :NUM_LABELS]


# --------------------------- deterministic params ------------------------------
def init_params(key):
    keys = iter(jax.random.split(key, 128))

    def w(shape):
        return (0.02 * jax.random.normal(next(keys), shape)).astype(jnp.float32)

    def zeros(shape):
        return jnp.zeros(shape, jnp.float32)

    def ones(shape):
        return jnp.ones(shape, jnp.float32)

    scale = 1.0 / math.sqrt(D_HEAD)
    Wqkv, bqkv, Wo, bo = [], [], [], []
    ln1_g, ln1_b, Wi, bi, Wd, bd, ln2_g, ln2_b = [], [], [], [], [], [], [], []
    for _ in range(N_LAYERS):
        Wq, Wk, Wv = w((H, H)), w((H, H)), w((H, H))
        bq, bk, bv = zeros((H,)), zeros((H,)), zeros((H,))
        # Fuse Q/K/V into one (H, 3H) weight and fold the 1/sqrt(d_head)
        # attention scale into the Q block (mathematically identical to scaling
        # the attention scores).
        Wqkv.append(jnp.concatenate([Wq * scale, Wk, Wv], axis=1))
        bqkv.append(jnp.concatenate([bq * scale, bk, bv])[None, :])
        Wo.append(w((H, H))); bo.append(zeros((1, H)))
        ln1_g.append(ones((1, H))); ln1_b.append(zeros((1, H)))
        Wi.append(w((H, INTERMEDIATE))); bi.append(zeros((1, INTERMEDIATE)))
        Wd.append(w((INTERMEDIATE, H))); bd.append(zeros((1, H)))
        ln2_g.append(ones((1, H))); ln2_b.append(zeros((1, H)))

    # classifier weight padded to 128 output lanes (zero columns 5..127)
    Wproj = w((H, NUM_LABELS))
    Wproj_pad = jnp.zeros((H, LOGITS_PAD), jnp.float32).at[:, :NUM_LABELS].set(Wproj)

    return {
        "word_emb": w((VOCAB, H)),
        "pos_emb": w((MAX_POS, H)),
        "type_emb": w((TYPE_VOCAB, H)),
        "emb_ln_g": ones((1, H)), "emb_ln_b": zeros((1, H)),
        "Wqkv": jnp.stack(Wqkv), "bqkv": jnp.stack(bqkv),
        "Wo": jnp.stack(Wo), "bo": jnp.stack(bo),
        "ln1_g": jnp.stack(ln1_g), "ln1_b": jnp.stack(ln1_b),
        "Wi": jnp.stack(Wi), "bi": jnp.stack(bi),
        "Wd": jnp.stack(Wd), "bd": jnp.stack(bd),
        "ln2_g": jnp.stack(ln2_g), "ln2_b": jnp.stack(ln2_b),
        "Wp": w((H, H)), "bp": zeros((1, H)),
        "Wproj": Wproj_pad, "bproj": zeros((1, LOGITS_PAD)),
    }


if __name__ == "__main__":
    key = jax.random.PRNGKey(0)
    k_param, k_ids = jax.random.split(key)
    params = init_params(k_param)

    input_ids = jax.random.randint(k_ids, (B, S), 0, VOCAB, dtype=jnp.int32)
    attention_mask = jnp.ones((B, S), jnp.int32).at[1, 6:].set(0)  # pad tail of batch 1

    logits = jax.jit(bert_sentiment_forward)(params, input_ids, attention_mask)
    logits = jax.block_until_ready(logits)
    assert logits.shape == (B, NUM_LABELS) and logits.dtype == jnp.float32
    print("KERNEL_OK")
</pallas_src>

<mosaic_0001>
module attributes {stable_mosaic.version = 11 : i64} {
  func.func @_fused_bert_kernel(%arg0: memref<16x32xf32, #tpu.memory_space<vmem>>, %arg1: memref<2x8xf32, #tpu.memory_space<vmem>>, %arg2: memref<1x32xf32, #tpu.memory_space<vmem>>, %arg3: memref<1x32xf32, #tpu.memory_space<vmem>>, %arg4: memref<2x32x96xf32, #tpu.memory_space<vmem>>, %arg5: memref<2x1x96xf32, #tpu.memory_space<vmem>>, %arg6: memref<2x32x32xf32, #tpu.memory_space<vmem>>, %arg7: memref<2x1x32xf32, #tpu.memory_space<vmem>>, %arg8: memref<2x1x32xf32, #tpu.memory_space<vmem>>, %arg9: memref<2x1x32xf32, #tpu.memory_space<vmem>>, %arg10: memref<2x32x64xf32, #tpu.memory_space<vmem>>, %arg11: memref<2x1x64xf32, #tpu.memory_space<vmem>>, %arg12: memref<2x64x32xf32, #tpu.memory_space<vmem>>, %arg13: memref<2x1x32xf32, #tpu.memory_space<vmem>>, %arg14: memref<2x1x32xf32, #tpu.memory_space<vmem>>, %arg15: memref<2x1x32xf32, #tpu.memory_space<vmem>>, %arg16: memref<32x32xf32, #tpu.memory_space<vmem>>, %arg17: memref<1x32xf32, #tpu.memory_space<vmem>>, %arg18: memref<32x128xf32, #tpu.memory_space<vmem>>, %arg19: memref<1x128xf32, #tpu.memory_space<vmem>>, %arg20: memref<2x128xf32, #tpu.memory_space<vmem>>) attributes {dimension_semantics = [], scalar_prefetch = 0 : i64, scratch_operands = 0 : i64, tpu.core_type = #tpu.core_type<tc>} {
    %c0 = arith.constant 0 : index
    %c0_0 = arith.constant 0 : index
    %0 = vector.load %arg1[%c0, %c0_0] : memref<2x8xf32, #tpu.memory_space<vmem>>, vector<2x8xf32>
    %cst = arith.constant 1.000000e+00 : f32
    %1 = vector.broadcast %cst : f32 to vector<2x8xf32>
    %2 = arith.subf %1, %0 : vector<2x8xf32>
    %cst_1 = arith.constant -1.000000e+04 : f32
    %3 = vector.broadcast %cst_1 : f32 to vector<2x8xf32>
    %4 = arith.mulf %2, %3 : vector<2x8xf32>
    %5 = vector.shape_cast %4 : vector<2x8xf32> to vector<2x1x8xf32>
    %c0_2 = arith.constant 0 : index
    %c0_3 = arith.constant 0 : index
    %6 = vector.load %arg0[%c0_2, %c0_3] : memref<16x32xf32, #tpu.memory_space<vmem>>, vector<16x32xf32>
    %c0_4 = arith.constant 0 : index
    %c0_5 = arith.constant 0 : index
    %7 = vector.load %arg2[%c0_4, %c0_5] : memref<1x32xf32, #tpu.memory_space<vmem>>, vector<1x32xf32>
    %c0_6 = arith.constant 0 : index
    %c0_7 = arith.constant 0 : index
    %8 = vector.load %arg3[%c0_6, %c0_7] : memref<1x32xf32, #tpu.memory_space<vmem>>, vector<1x32xf32>
    %cst_8 = arith.constant dense<0.000000e+00> : vector<16xf32>
    %9 = vector.multi_reduction <add>, %6, %cst_8 [1] : vector<16x32xf32> to vector<16xf32>
    %10 = vector.shape_cast %9 : vector<16xf32> to vector<16x1xf32>
    %cst_9 = arith.constant 3.200000e+01 : f32
    %11 = vector.broadcast %cst_9 : f32 to vector<16x1xf32>
    %12 = arith.divf %10, %11 : vector<16x1xf32>
    %13 = vector.broadcast %12 : vector<16x1xf32> to vector<16x32xf32>
    %14 = arith.subf %6, %13 : vector<16x32xf32>
    %15 = arith.mulf %14, %14 : vector<16x32xf32>
    %cst_10 = arith.constant dense<0.000000e+00> : vector<16xf32>
    %16 = vector.multi_reduction <add>, %15, %cst_10 [1] : vector<16x32xf32> to vector<16xf32>
    %17 = vector.shape_cast %16 : vector<16xf32> to vector<16x1xf32>
    %cst_11 = arith.constant 3.200000e+01 : f32
    %18 = vector.broadcast %cst_11 : f32 to vector<16x1xf32>
    %19 = arith.divf %17, %18 : vector<16x1xf32>
    %cst_12 = arith.constant 9.99999996E-13 : f32
    %20 = vector.broadcast %cst_12 : f32 to vector<16x1xf32>
    %21 = arith.addf %19, %20 : vector<16x1xf32>
    %22 = math.rsqrt %21 : vector<16x1xf32>
    %23 = vector.broadcast %22 : vector<16x1xf32> to vector<16x32xf32>
    %24 = arith.mulf %14, %23 : vector<16x32xf32>
    %25 = vector.broadcast %7 : vector<1x32xf32> to vector<16x32xf32>
    %26 = arith.mulf %24, %25 : vector<16x32xf32>
    %27 = vector.broadcast %8 : vector<1x32xf32> to vector<16x32xf32>
    %28 = arith.addf %26, %27 : vector<16x32xf32>
    %c0_13 = arith.constant 0 : index
    %c0_14 = arith.constant 0 : index
    %c0_15 = arith.constant 0 : index
    %29 = vector.load %arg4[%c0_13, %c0_14, %c0_15] : memref<2x32x96xf32, #tpu.memory_space<vmem>>, vector<1x32x96xf32>
    %30 = vector.shape_cast %29 : vector<1x32x96xf32> to vector<32x96xf32>
    %cst_16 = arith.constant dense<0.000000e+00> : vector<16x96xf32>
    %31 = tpu.matmul %28, %30, %cst_16 {dimension_numbers = #tpu.dot_dimension_numbers<[1], [0], [0], [1], [0, 0, 1, 1], [], []>} : vector<16x32xf32>, vector<32x96xf32>, vector<16x96xf32> -> vector<16x96xf32>
    %c0_17 = arith.constant 0 : index
    %c0_18 = arith.constant 0 : index
    %c0_19 = arith.constant 0 : index
    %32 = vector.load %arg5[%c0_17, %c0_18, %c0_19] : memref<2x1x96xf32, #tpu.memory_space<vmem>>, vector<1x1x96xf32>
    %33 = vector.shape_cast %32 : vector<1x1x96xf32> to vector<1x96xf32>
    %34 = vector.broadcast %33 : vector<1x96xf32> to vector<16x96xf32>
    %35 = arith.addf %31, %34 : vector<16x96xf32>
    %36 = vector.extract_strided_slice %35 {offsets = [0, 0], sizes = [16, 16], strides = [1, 1]} : vector<16x96xf32> to vector<16x16xf32>
    %37 = vector.shape_cast %36 : vector<16x16xf32> to vector<2x8x16xf32>
    %38 = vector.extract_strided_slice %35 {offsets = [0, 32], sizes = [16, 16], strides = [1, 1]} : vector<16x96xf32> to vector<16x16xf32>
    %39 = vector.shape_cast %38 : vector<16x16xf32> to vector<2x8x16xf32>
    %40 = vector.extract_strided_slice %35 {offsets = [0, 64], sizes = [16, 16], strides = [1, 1]} : vector<16x96xf32> to vector<16x16xf32>
    %41 = vector.shape_cast %40 : vector<16x16xf32> to vector<2x8x16xf32>
    "tpu.trace_start"() <{level = 10 : i32, message = "bqd,bkd->bqk"}> : () -> ()
    %cst_20 = arith.constant dense<0.000000e+00> : vector<2x8x8xf32>
    %42 = tpu.matmul %37, %39, %cst_20 {dimension_numbers = #tpu.dot_dimension_numbers<[2], [2], [1], [1], [0, 0, 0, 1, 1, 1], [0], [0]>} : vector<2x8x16xf32>, vector<2x8x16xf32>, vector<2x8x8xf32> -> vector<2x8x8xf32>
    "tpu.trace_stop"() : () -> ()
    %43 = vector.broadcast %5 : vector<2x1x8xf32> to vector<2x8x8xf32>
    %44 = arith.addf %42, %43 : vector<2x8x8xf32>
    %cst_21 = arith.constant dense<0xFF800000> : vector<2x8xf32>
    %45 = vector.multi_reduction <maximumf>, %44, %cst_21 [2] : vector<2x8x8xf32> to vector<2x8xf32>
    %46 = vector.shape_cast %45 : vector<2x8xf32> to vector<2x8x1xf32>
    %47 = vector.broadcast %46 : vector<2x8x1xf32> to vector<2x8x8xf32>
    %48 = arith.subf %44, %47 : vector<2x8x8xf32>
    %49 = math.exp %48 : vector<2x8x8xf32>
    %cst_22 = arith.constant dense<0.000000e+00> : vector<2x8xf32>
    %50 = vector.multi_reduction <add>, %49, %cst_22 [2] : vector<2x8x8xf32> to vector<2x8xf32>
    %51 = vector.shape_cast %50 : vector<2x8xf32> to vector<2x8x1xf32>
    %52 = tpu.reciprocal %51 {approx = true} : vector<2x8x1xf32> -> vector<2x8x1xf32>
    %53 = vector.broadcast %52 : vector<2x8x1xf32> to vector<2x8x8xf32>
    %54 = arith.mulf %49, %53 : vector<2x8x8xf32>
    "tpu.trace_start"() <{level = 10 : i32, message = "bqk,bkd->bqd"}> : () -> ()
    %cst_23 = arith.constant dense<0.000000e+00> : vector<2x8x16xf32>
    %55 = tpu.matmul %54, %41, %cst_23 {dimension_numbers = #tpu.dot_dimension_numbers<[2], [1], [1], [2], [0, 0, 0, 1, 1, 2], [0], [0]>} : vector<2x8x8xf32>, vector<2x8x16xf32>, vector<2x8x16xf32> -> vector<2x8x16xf32>
    "tpu.trace_stop"() : () -> ()
    %56 = vector.shape_cast %55 : vector<2x8x16xf32> to vector<16x16xf32>
    %57 = vector.extract_strided_slice %35 {offsets = [0, 16], sizes = [16, 16], strides = [1, 1]} : vector<16x96xf32> to vector<16x16xf32>
    %58 = vector.shape_cast %57 : vector<16x16xf32> to vector<2x8x16xf32>
    %59 = vector.extract_strided_slice %35 {offsets = [0, 48], sizes = [16, 16], strides = [1, 1]} : vector<16x96xf32> to vector<16x16xf32>
    %60 = vector.shape_cast %59 : vector<16x16xf32> to vector<2x8x16xf32>
    %61 = vector.extract_strided_slice %35 {offsets = [0, 80], sizes = [16, 16], strides = [1, 1]} : vector<16x96xf32> to vector<16x16xf32>
    %62 = vector.shape_cast %61 : vector<16x16xf32> to vector<2x8x16xf32>
    "tpu.trace_start"() <{level = 10 : i32, message = "bqd,bkd->bqk"}> : () -> ()
    %cst_24 = arith.constant dense<0.000000e+00> : vector<2x8x8xf32>
    %63 = tpu.matmul %58, %60, %cst_24 {dimension_numbers = #tpu.dot_dimension_numbers<[2], [2], [1], [1], [0, 0, 0, 1, 1, 1], [0], [0]>} : vector<2x8x16xf32>, vector<2x8x16xf32>, vector<2x8x8xf32> -> vector<2x8x8xf32>
    "tpu.trace_stop"() : () -> ()
    %64 = vector.broadcast %5 : vector<2x1x8xf32> to vector<2x8x8xf32>
    %65 = arith.addf %63, %64 : vector<2x8x8xf32>
    %cst_25 = arith.constant dense<0xFF800000> : vector<2x8xf32>
    %66 = vector.multi_reduction <maximumf>, %65, %cst_25 [2] : vector<2x8x8xf32> to vector<2x8xf32>
    %67 = vector.shape_cast %66 : vector<2x8xf32> to vector<2x8x1xf32>
    %68 = vector.broadcast %67 : vector<2x8x1xf32> to vector<2x8x8xf32>
    %69 = arith.subf %65, %68 : vector<2x8x8xf32>
    %70 = math.exp %69 : vector<2x8x8xf32>
    %cst_26 = arith.constant dense<0.000000e+00> : vector<2x8xf32>
    %71 = vector.multi_reduction <add>, %70, %cst_26 [2] : vector<2x8x8xf32> to vector<2x8xf32>
    %72 = vector.shape_cast %71 : vector<2x8xf32> to vector<2x8x1xf32>
    %73 = tpu.reciprocal %72 {approx = true} : vector<2x8x1xf32> -> vector<2x8x1xf32>
    %74 = vector.broadcast %73 : vector<2x8x1xf32> to vector<2x8x8xf32>
    %75 = arith.mulf %70, %74 : vector<2x8x8xf32>
    "tpu.trace_start"() <{level = 10 : i32, message = "bqk,bkd->bqd"}> : () -> ()
    %cst_27 = arith.constant dense<0.000000e+00> : vector<2x8x16xf32>
    %76 = tpu.matmul %75, %62, %cst_27 {dimension_numbers = #tpu.dot_dimension_numbers<[2], [1], [1], [2], [0, 0, 0, 1, 1, 2], [0], [0]>} : vector<2x8x8xf32>, vector<2x8x16xf32>, vector<2x8x16xf32> -> vector<2x8x16xf32>
    "tpu.trace_stop"() : () -> ()
    %77 = vector.shape_cast %76 : vector<2x8x16xf32> to vector<16x16xf32>
    %78 = tpu.concatenate %56, %77 in 1 : vector<16x16xf32>, vector<16x16xf32> -> vector<16x32xf32>
    %c0_28 = arith.constant 0 : index
    %c0_29 = arith.constant 0 : index
    %c0_30 = arith.constant 0 : index
    %79 = vector.load %arg6[%c0_28, %c0_29, %c0_30] : memref<2x32x32xf32, #tpu.memory_space<vmem>>, vector<1x32x32xf32>
    %80 = vector.shape_cast %79 : vector<1x32x32xf32> to vector<32x32xf32>
    %cst_31 = arith.constant dense<0.000000e+00> : vector<16x32xf32>
    %81 = tpu.matmul %78, %80, %cst_31 {dimension_numbers = #tpu.dot_dimension_numbers<[1], [0], [0], [1], [0, 0, 1, 1], [], []>} : vector<16x32xf32>, vector<32x32xf32>, vector<16x32xf32> -> vector<16x32xf32>
    %82 = arith.addf %28, %81 : vector<16x32xf32>
    %c0_32 = arith.constant 0 : index
    %c0_33 = arith.constant 0 : index
    %c0_34 = arith.constant 0 : index
    %83 = vector.load %arg7[%c0_32, %c0_33, %c0_34] : memref<2x1x32xf32, #tpu.memory_space<vmem>>, vector<1x1x32xf32>
    %84 = vector.shape_cast %83 : vector<1x1x32xf32> to vector<1x32xf32>
    %85 = vector.broadcast %84 : vector<1x32xf32> to vector<16x32xf32>
    %86 = arith.addf %82, %85 : vector<16x32xf32>
    %c0_35 = arith.constant 0 : index
    %c0_36 = arith.constant 0 : index
    %c0_37 = arith.constant 0 : index
    %87 = vector.load %arg8[%c0_35, %c0_36, %c0_37] : memref<2x1x32xf32, #tpu.memory_space<vmem>>, vector<1x1x32xf32>
    %88 = vector.shape_cast %87 : vector<1x1x32xf32> to vector<1x32xf32>
    %c0_38 = arith.constant 0 : index
    %c0_39 = arith.constant 0 : index
    %c0_40 = arith.constant 0 : index
    %89 = vector.load %arg9[%c0_38, %c0_39, %c0_40] : memref<2x1x32xf32, #tpu.memory_space<vmem>>, vector<1x1x32xf32>
    %90 = vector.shape_cast %89 : vector<1x1x32xf32> to vector<1x32xf32>
    %cst_41 = arith.constant dense<0.000000e+00> : vector<16xf32>
    %91 = vector.multi_reduction <add>, %86, %cst_41 [1] : vector<16x32xf32> to vector<16xf32>
    %92 = vector.shape_cast %91 : vector<16xf32> to vector<16x1xf32>
    %cst_42 = arith.constant 3.200000e+01 : f32
    %93 = vector.broadcast %cst_42 : f32 to vector<16x1xf32>
    %94 = arith.divf %92, %93 : vector<16x1xf32>
    %95 = vector.broadcast %94 : vector<16x1xf32> to vector<16x32xf32>
    %96 = arith.subf %86, %95 : vector<16x32xf32>
    %97 = arith.mulf %96, %96 : vector<16x32xf32>
    %cst_43 = arith.constant dense<0.000000e+00> : vector<16xf32>
    %98 = vector.multi_reduction <add>, %97, %cst_43 [1] : vector<16x32xf32> to vector<16xf32>
    %99 = vector.shape_cast %98 : vector<16xf32> to vector<16x1xf32>
    %cst_44 = arith.constant 3.200000e+01 : f32
    %100 = vector.broadcast %cst_44 : f32 to vector<16x1xf32>
    %101 = arith.divf %99, %100 : vector<16x1xf32>
    %cst_45 = arith.constant 9.99999996E-13 : f32
    %102 = vector.broadcast %cst_45 : f32 to vector<16x1xf32>
    %103 = arith.addf %101, %102 : vector<16x1xf32>
    %104 = math.rsqrt %103 : vector<16x1xf32>
    %105 = vector.broadcast %104 : vector<16x1xf32> to vector<16x32xf32>
    %106 = arith.mulf %96, %105 : vector<16x32xf32>
    %107 = vector.broadcast %88 : vector<1x32xf32> to vector<16x32xf32>
    %108 = arith.mulf %106, %107 : vector<16x32xf32>
    %109 = vector.broadcast %90 : vector<1x32xf32> to vector<16x32xf32>
    %110 = arith.addf %108, %109 : vector<16x32xf32>
    %c0_46 = arith.constant 0 : index
    %c0_47 = arith.constant 0 : index
    %c0_48 = arith.constant 0 : index
    %111 = vector.load %arg10[%c0_46, %c0_47, %c0_48] : memref<2x32x64xf32, #tpu.memory_space<vmem>>, vector<1x32x64xf32>
    %112 = vector.shape_cast %111 : vector<1x32x64xf32> to vector<32x64xf32>
    %cst_49 = arith.constant dense<0.000000e+00> : vector<16x64xf32>
    %113 = tpu.matmul %110, %112, %cst_49 {dimension_numbers = #tpu.dot_dimension_numbers<[1], [0], [0], [1], [0, 0, 1, 1], [], []>} : vector<16x32xf32>, vector<32x64xf32>, vector<16x64xf32> -> vector<16x64xf32>
    %c0_50 = arith.constant 0 : index
    %c0_51 = arith.constant 0 : index
    %c0_52 = arith.constant 0 : index
    %114 = vector.load %arg11[%c0_50, %c0_51, %c0_52] : memref<2x1x64xf32, #tpu.memory_space<vmem>>, vector<1x1x64xf32>
    %115 = vector.shape_cast %114 : vector<1x1x64xf32> to vector<1x64xf32>
    %116 = vector.broadcast %115 : vector<1x64xf32> to vector<16x64xf32>
    %117 = arith.addf %113, %116 : vector<16x64xf32>
    %cst_53 = arith.constant 5.000000e-01 : f32
    %118 = vector.broadcast %cst_53 : f32 to vector<16x64xf32>
    %119 = arith.mulf %118, %117 : vector<16x64xf32>
    %cst_54 = arith.constant 4.471500e-02 : f32
    %120 = vector.broadcast %cst_54 : f32 to vector<16x64xf32>
    %121 = arith.mulf %120, %117 : vector<16x64xf32>
    %122 = arith.mulf %121, %117 : vector<16x64xf32>
    %123 = arith.mulf %122, %117 : vector<16x64xf32>
    %124 = arith.addf %117, %123 : vector<16x64xf32>
    %cst_55 = arith.constant 0.797884583 : f32
    %125 = vector.broadcast %cst_55 : f32 to vector<16x64xf32>
    %126 = arith.mulf %125, %124 : vector<16x64xf32>
    %127 = math.tanh %126 : vector<16x64xf32>
    %cst_56 = arith.constant 1.000000e+00 : f32
    %128 = vector.broadcast %cst_56 : f32 to vector<16x64xf32>
    %129 = arith.addf %128, %127 : vector<16x64xf32>
    %130 = arith.mulf %119, %129 : vector<16x64xf32>
    %c0_57 = arith.constant 0 : index
    %c0_58 = arith.constant 0 : index
    %c0_59 = arith.constant 0 : index
    %131 = vector.load %arg12[%c0_57, %c0_58, %c0_59] : memref<2x64x32xf32, #tpu.memory_space<vmem>>, vector<1x64x32xf32>
    %132 = vector.shape_cast %131 : vector<1x64x32xf32> to vector<64x32xf32>
    %cst_60 = arith.constant dense<0.000000e+00> : vector<16x32xf32>
    %133 = tpu.matmul %130, %132, %cst_60 {dimension_numbers = #tpu.dot_dimension_numbers<[1], [0], [0], [1], [0, 0, 1, 1], [], []>} : vector<16x64xf32>, vector<64x32xf32>, vector<16x32xf32> -> vector<16x32xf32>
    %134 = arith.addf %110, %133 : vector<16x32xf32>
    %c0_61 = arith.constant 0 : index
    %c0_62 = arith.constant 0 : index
    %c0_63 = arith.constant 0 : index
    %135 = vector.load %arg13[%c0_61, %c0_62, %c0_63] : memref<2x1x32xf32, #tpu.memory_space<vmem>>, vector<1x1x32xf32>
    %136 = vector.shape_cast %135 : vector<1x1x32xf32> to vector<1x32xf32>
    %137 = vector.broadcast %136 : vector<1x32xf32> to vector<16x32xf32>
    %138 = arith.addf %134, %137 : vector<16x32xf32>
    %c0_64 = arith.constant 0 : index
    %c0_65 = arith.constant 0 : index
    %c0_66 = arith.constant 0 : index
    %139 = vector.load %arg14[%c0_64, %c0_65, %c0_66] : memref<2x1x32xf32, #tpu.memory_space<vmem>>, vector<1x1x32xf32>
    %140 = vector.shape_cast %139 : vector<1x1x32xf32> to vector<1x32xf32>
    %c0_67 = arith.constant 0 : index
    %c0_68 = arith.constant 0 : index
    %c0_69 = arith.constant 0 : index
    %141 = vector.load %arg15[%c0_67, %c0_68, %c0_69] : memref<2x1x32xf32, #tpu.memory_space<vmem>>, vector<1x1x32xf32>
    %142 = vector.shape_cast %141 : vector<1x1x32xf32> to vector<1x32xf32>
    %cst_70 = arith.constant dense<0.000000e+00> : vector<16xf32>
    %143 = vector.multi_reduction <add>, %138, %cst_70 [1] : vector<16x32xf32> to vector<16xf32>
    %144 = vector.shape_cast %143 : vector<16xf32> to vector<16x1xf32>
    %cst_71 = arith.constant 3.200000e+01 : f32
    %145 = vector.broadcast %cst_71 : f32 to vector<16x1xf32>
    %146 = arith.divf %144, %145 : vector<16x1xf32>
    %147 = vector.broadcast %146 : vector<16x1xf32> to vector<16x32xf32>
    %148 = arith.subf %138, %147 : vector<16x32xf32>
    %149 = arith.mulf %148, %148 : vector<16x32xf32>
    %cst_72 = arith.constant dense<0.000000e+00> : vector<16xf32>
    %150 = vector.multi_reduction <add>, %149, %cst_72 [1] : vector<16x32xf32> to vector<16xf32>
    %151 = vector.shape_cast %150 : vector<16xf32> to vector<16x1xf32>
    %cst_73 = arith.constant 3.200000e+01 : f32
    %152 = vector.broadcast %cst_73 : f32 to vector<16x1xf32>
    %153 = arith.divf %151, %152 : vector<16x1xf32>
    %cst_74 = arith.constant 9.99999996E-13 : f32
    %154 = vector.broadcast %cst_74 : f32 to vector<16x1xf32>
    %155 = arith.addf %153, %154 : vector<16x1xf32>
    %156 = math.rsqrt %155 : vector<16x1xf32>
    %157 = vector.broadcast %156 : vector<16x1xf32> to vector<16x32xf32>
    %158 = arith.mulf %148, %157 : vector<16x32xf32>
    %159 = vector.broadcast %140 : vector<1x32xf32> to vector<16x32xf32>
    %160 = arith.mulf %158, %159 : vector<16x32xf32>
    %161 = vector.broadcast %142 : vector<1x32xf32> to vector<16x32xf32>
    %162 = arith.addf %160, %161 : vector<16x32xf32>
    %c1 = arith.constant 1 : index
    %c0_75 = arith.constant 0 : index
    %c0_76 = arith.constant 0 : index
    %163 = vector.load %arg4[%c1, %c0_75, %c0_76] : memref<2x32x96xf32, #tpu.memory_space<vmem>>, vector<1x32x96xf32>
    %164 = vector.shape_cast %163 : vector<1x32x96xf32> to vector<32x96xf32>
    %cst_77 = arith.constant dense<0.000000e+00> : vector<16x96xf32>
    %165 = tpu.matmul %162, %164, %cst_77 {dimension_numbers = #tpu.dot_dimension_numbers<[1], [0], [0], [1], [0, 0, 1, 1], [], []>} : vector<16x32xf32>, vector<32x96xf32>, vector<16x96xf32> -> vector<16x96xf32>
    %c1_78 = arith.constant 1 : index
    %c0_79 = arith.constant 0 : index
    %c0_80 = arith.constant 0 : index
    %166 = vector.load %arg5[%c1_78, %c0_79, %c0_80] : memref<2x1x96xf32, #tpu.memory_space<vmem>>, vector<1x1x96xf32>
    %167 = vector.shape_cast %166 : vector<1x1x96xf32> to vector<1x96xf32>
    %168 = vector.broadcast %167 : vector<1x96xf32> to vector<16x96xf32>
    %169 = arith.addf %165, %168 : vector<16x96xf32>
    %170 = vector.extract_strided_slice %169 {offsets = [0, 0], sizes = [16, 16], strides = [1, 1]} : vector<16x96xf32> to vector<16x16xf32>
    %171 = vector.shape_cast %170 : vector<16x16xf32> to vector<2x8x16xf32>
    %172 = vector.extract_strided_slice %169 {offsets = [0, 32], sizes = [16, 16], strides = [1, 1]} : vector<16x96xf32> to vector<16x16xf32>
    %173 = vector.shape_cast %172 : vector<16x16xf32> to vector<2x8x16xf32>
    %174 = vector.extract_strided_slice %169 {offsets = [0, 64], sizes = [16, 16], strides = [1, 1]} : vector<16x96xf32> to vector<16x16xf32>
    %175 = vector.shape_cast %174 : vector<16x16xf32> to vector<2x8x16xf32>
    "tpu.trace_start"() <{level = 10 : i32, message = "bqd,bkd->bqk"}> : () -> ()
    %cst_81 = arith.constant dense<0.000000e+00> : vector<2x8x8xf32>
    %176 = tpu.matmul %171, %173, %cst_81 {dimension_numbers = #tpu.dot_dimension_numbers<[2], [2], [1], [1], [0, 0, 0, 1, 1, 1], [0], [0]>} : vector<2x8x16xf32>, vector<2x8x16xf32>, vector<2x8x8xf32> -> vector<2x8x8xf32>
    "tpu.trace_stop"() : () -> ()
    %177 = vector.broadcast %5 : vector<2x1x8xf32> to vector<2x8x8xf32>
    %178 = arith.addf %176, %177 : vector<2x8x8xf32>
    %cst_82 = arith.constant dense<0xFF800000> : vector<2x8xf32>
    %179 = vector.multi_reduction <maximumf>, %178, %cst_82 [2] : vector<2x8x8xf32> to vector<2x8xf32>
    %180 = vector.shape_cast %179 : vector<2x8xf32> to vector<2x8x1xf32>
    %181 = vector.broadcast %180 : vector<2x8x1xf32> to vector<2x8x8xf32>
    %182 = arith.subf %178, %181 : vector<2x8x8xf32>
    %183 = math.exp %182 : vector<2x8x8xf32>
    %cst_83 = arith.constant dense<0.000000e+00> : vector<2x8xf32>
    %184 = vector.multi_reduction <add>, %183, %cst_83 [2] : vector<2x8x8xf32> to vector<2x8xf32>
    %185 = vector.shape_cast %184 : vector<2x8xf32> to vector<2x8x1xf32>
    %186 = tpu.reciprocal %185 {approx = true} : vector<2x8x1xf32> -> vector<2x8x1xf32>
    %187 = vector.broadcast %186 : vector<2x8x1xf32> to vector<2x8x8xf32>
    %188 = arith.mulf %183, %187 : vector<2x8x8xf32>
    "tpu.trace_start"() <{level = 10 : i32, message = "bqk,bkd->bqd"}> : () -> ()
    %cst_84 = arith.constant dense<0.000000e+00> : vector<2x8x16xf32>
    %189 = tpu.matmul %188, %175, %cst_84 {dimension_numbers = #tpu.dot_dimension_numbers<[2], [1], [1], [2], [0, 0, 0, 1, 1, 2], [0], [0]>} : vector<2x8x8xf32>, vector<2x8x16xf32>, vector<2x8x16xf32> -> vector<2x8x16xf32>
    "tpu.trace_stop"() : () -> ()
    %190 = vector.shape_cast %189 : vector<2x8x16xf32> to vector<16x16xf32>
    %191 = vector.extract_strided_slice %169 {offsets = [0, 16], sizes = [16, 16], strides = [1, 1]} : vector<16x96xf32> to vector<16x16xf32>
    %192 = vector.shape_cast %191 : vector<16x16xf32> to vector<2x8x16xf32>
    %193 = vector.extract_strided_slice %169 {offsets = [0, 48], sizes = [16, 16], strides = [1, 1]} : vector<16x96xf32> to vector<16x16xf32>
    %194 = vector.shape_cast %193 : vector<16x16xf32> to vector<2x8x16xf32>
    %195 = vector.extract_strided_slice %169 {offsets = [0, 80], sizes = [16, 16], strides = [1, 1]} : vector<16x96xf32> to vector<16x16xf32>
    %196 = vector.shape_cast %195 : vector<16x16xf32> to vector<2x8x16xf32>
    "tpu.trace_start"() <{level = 10 : i32, message = "bqd,bkd->bqk"}> : () -> ()
    %cst_85 = arith.constant dense<0.000000e+00> : vector<2x8x8xf32>
    %197 = tpu.matmul %192, %194, %cst_85 {dimension_numbers = #tpu.dot_dimension_numbers<[2], [2], [1], [1], [0, 0, 0, 1, 1, 1], [0], [0]>} : vector<2x8x16xf32>, vector<2x8x16xf32>, vector<2x8x8xf32> -> vector<2x8x8xf32>
    "tpu.trace_stop"() : () -> ()
    %198 = vector.broadcast %5 : vector<2x1x8xf32> to vector<2x8x8xf32>
    %199 = arith.addf %197, %198 : vector<2x8x8xf32>
    %cst_86 = arith.constant dense<0xFF800000> : vector<2x8xf32>
    %200 = vector.multi_reduction <maximumf>, %199, %cst_86 [2] : vector<2x8x8xf32> to vector<2x8xf32>
    %201 = vector.shape_cast %200 : vector<2x8xf32> to vector<2x8x1xf32>
    %202 = vector.broadcast %201 : vector<2x8x1xf32> to vector<2x8x8xf32>
    %203 = arith.subf %199, %202 : vector<2x8x8xf32>
    %204 = math.exp %203 : vector<2x8x8xf32>
    %cst_87 = arith.constant dense<0.000000e+00> : vector<2x8xf32>
    %205 = vector.multi_reduction <add>, %204, %cst_87 [2] : vector<2x8x8xf32> to vector<2x8xf32>
    %206 = vector.shape_cast %205 : vector<2x8xf32> to vector<2x8x1xf32>
    %207 = tpu.reciprocal %206 {approx = true} : vector<2x8x1xf32> -> vector<2x8x1xf32>
    %208 = vector.broadcast %207 : vector<2x8x1xf32> to vector<2x8x8xf32>
    %209 = arith.mulf %204, %208 : vector<2x8x8xf32>
    "tpu.trace_start"() <{level = 10 : i32, message = "bqk,bkd->bqd"}> : () -> ()
    %cst_88 = arith.constant dense<0.000000e+00> : vector<2x8x16xf32>
    %210 = tpu.matmul %209, %196, %cst_88 {dimension_numbers = #tpu.dot_dimension_numbers<[2], [1], [1], [2], [0, 0, 0, 1, 1, 2], [0], [0]>} : vector<2x8x8xf32>, vector<2x8x16xf32>, vector<2x8x16xf32> -> vector<2x8x16xf32>
    "tpu.trace_stop"() : () -> ()
    %211 = vector.shape_cast %210 : vector<2x8x16xf32> to vector<16x16xf32>
    %212 = tpu.concatenate %190, %211 in 1 : vector<16x16xf32>, vector<16x16xf32> -> vector<16x32xf32>
    %c1_89 = arith.constant 1 : index
    %c0_90 = arith.constant 0 : index
    %c0_91 = arith.constant 0 : index
    %213 = vector.load %arg6[%c1_89, %c0_90, %c0_91] : memref<2x32x32xf32, #tpu.memory_space<vmem>>, vector<1x32x32xf32>
    %214 = vector.shape_cast %213 : vector<1x32x32xf32> to vector<32x32xf32>
    %cst_92 = arith.constant dense<0.000000e+00> : vector<16x32xf32>
    %215 = tpu.matmul %212, %214, %cst_92 {dimension_numbers = #tpu.dot_dimension_numbers<[1], [0], [0], [1], [0, 0, 1, 1], [], []>} : vector<16x32xf32>, vector<32x32xf32>, vector<16x32xf32> -> vector<16x32xf32>
    %216 = arith.addf %162, %215 : vector<16x32xf32>
    %c1_93 = arith.constant 1 : index
    %c0_94 = arith.constant 0 : index
    %c0_95 = arith.constant 0 : index
    %217 = vector.load %arg7[%c1_93, %c0_94, %c0_95] : memref<2x1x32xf32, #tpu.memory_space<vmem>>, vector<1x1x32xf32>
    %218 = vector.shape_cast %217 : vector<1x1x32xf32> to vector<1x32xf32>
    %219 = vector.broadcast %218 : vector<1x32xf32> to vector<16x32xf32>
    %220 = arith.addf %216, %219 : vector<16x32xf32>
    %c1_96 = arith.constant 1 : index
    %c0_97 = arith.constant 0 : index
    %c0_98 = arith.constant 0 : index
    %221 = vector.load %arg8[%c1_96, %c0_97, %c0_98] : memref<2x1x32xf32, #tpu.memory_space<vmem>>, vector<1x1x32xf32>
    %222 = vector.shape_cast %221 : vector<1x1x32xf32> to vector<1x32xf32>
    %c1_99 = arith.constant 1 : index
    %c0_100 = arith.constant 0 : index
    %c0_101 = arith.constant 0 : index
    %223 = vector.load %arg9[%c1_99, %c0_100, %c0_101] : memref<2x1x32xf32, #tpu.memory_space<vmem>>, vector<1x1x32xf32>
    %224 = vector.shape_cast %223 : vector<1x1x32xf32> to vector<1x32xf32>
    %cst_102 = arith.constant dense<0.000000e+00> : vector<16xf32>
    %225 = vector.multi_reduction <add>, %220, %cst_102 [1] : vector<16x32xf32> to vector<16xf32>
    %226 = vector.shape_cast %225 : vector<16xf32> to vector<16x1xf32>
    %cst_103 = arith.constant 3.200000e+01 : f32
    %227 = vector.broadcast %cst_103 : f32 to vector<16x1xf32>
    %228 = arith.divf %226, %227 : vector<16x1xf32>
    %229 = vector.broadcast %228 : vector<16x1xf32> to vector<16x32xf32>
    %230 = arith.subf %220, %229 : vector<16x32xf32>
    %231 = arith.mulf %230, %230 : vector<16x32xf32>
    %cst_104 = arith.constant dense<0.000000e+00> : vector<16xf32>
    %232 = vector.multi_reduction <add>, %231, %cst_104 [1] : vector<16x32xf32> to vector<16xf32>
    %233 = vector.shape_cast %232 : vector<16xf32> to vector<16x1xf32>
    %cst_105 = arith.constant 3.200000e+01 : f32
    %234 = vector.broadcast %cst_105 : f32 to vector<16x1xf32>
    %235 = arith.divf %233, %234 : vector<16x1xf32>
    %cst_106 = arith.constant 9.99999996E-13 : f32
    %236 = vector.broadcast %cst_106 : f32 to vector<16x1xf32>
    %237 = arith.addf %235, %236 : vector<16x1xf32>
    %238 = math.rsqrt %237 : vector<16x1xf32>
    %239 = vector.broadcast %238 : vector<16x1xf32> to vector<16x32xf32>
    %240 = arith.mulf %230, %239 : vector<16x32xf32>
    %241 = vector.broadcast %222 : vector<1x32xf32> to vector<16x32xf32>
    %242 = arith.mulf %240, %241 : vector<16x32xf32>
    %243 = vector.broadcast %224 : vector<1x32xf32> to vector<16x32xf32>
    %244 = arith.addf %242, %243 : vector<16x32xf32>
    %c1_107 = arith.constant 1 : index
    %c0_108 = arith.constant 0 : index
    %c0_109 = arith.constant 0 : index
    %245 = vector.load %arg10[%c1_107, %c0_108, %c0_109] : memref<2x32x64xf32, #tpu.memory_space<vmem>>, vector<1x32x64xf32>
    %246 = vector.shape_cast %245 : vector<1x32x64xf32> to vector<32x64xf32>
    %cst_110 = arith.constant dense<0.000000e+00> : vector<16x64xf32>
    %247 = tpu.matmul %244, %246, %cst_110 {dimension_numbers = #tpu.dot_dimension_numbers<[1], [0], [0], [1], [0, 0, 1, 1], [], []>} : vector<16x32xf32>, vector<32x64xf32>, vector<16x64xf32> -> vector<16x64xf32>
    %c1_111 = arith.constant 1 : index
    %c0_112 = arith.constant 0 : index
    %c0_113 = arith.constant 0 : index
    %248 = vector.load %arg11[%c1_111, %c0_112, %c0_113] : memref<2x1x64xf32, #tpu.memory_space<vmem>>, vector<1x1x64xf32>
    %249 = vector.shape_cast %248 : vector<1x1x64xf32> to vector<1x64xf32>
    %250 = vector.broadcast %249 : vector<1x64xf32> to vector<16x64xf32>
    %251 = arith.addf %247, %250 : vector<16x64xf32>
    %cst_114 = arith.constant 5.000000e-01 : f32
    %252 = vector.broadcast %cst_114 : f32 to vector<16x64xf32>
    %253 = arith.mulf %252, %251 : vector<16x64xf32>
    %cst_115 = arith.constant 4.471500e-02 : f32
    %254 = vector.broadcast %cst_115 : f32 to vector<16x64xf32>
    %255 = arith.mulf %254, %251 : vector<16x64xf32>
    %256 = arith.mulf %255, %251 : vector<16x64xf32>
    %257 = arith.mulf %256, %251 : vector<16x64xf32>
    %258 = arith.addf %251, %257 : vector<16x64xf32>
    %cst_116 = arith.constant 0.797884583 : f32
    %259 = vector.broadcast %cst_116 : f32 to vector<16x64xf32>
    %260 = arith.mulf %259, %258 : vector<16x64xf32>
    %261 = math.tanh %260 : vector<16x64xf32>
    %cst_117 = arith.constant 1.000000e+00 : f32
    %262 = vector.broadcast %cst_117 : f32 to vector<16x64xf32>
    %263 = arith.addf %262, %261 : vector<16x64xf32>
    %264 = arith.mulf %253, %263 : vector<16x64xf32>
    %c1_118 = arith.constant 1 : index
    %c0_119 = arith.constant 0 : index
    %c0_120 = arith.constant 0 : index
    %265 = vector.load %arg12[%c1_118, %c0_119, %c0_120] : memref<2x64x32xf32, #tpu.memory_space<vmem>>, vector<1x64x32xf32>
    %266 = vector.shape_cast %265 : vector<1x64x32xf32> to vector<64x32xf32>
    %cst_121 = arith.constant dense<0.000000e+00> : vector<16x32xf32>
    %267 = tpu.matmul %264, %266, %cst_121 {dimension_numbers = #tpu.dot_dimension_numbers<[1], [0], [0], [1], [0, 0, 1, 1], [], []>} : vector<16x64xf32>, vector<64x32xf32>, vector<16x32xf32> -> vector<16x32xf32>
    %268 = arith.addf %244, %267 : vector<16x32xf32>
    %c1_122 = arith.constant 1 : index
    %c0_123 = arith.constant 0 : index
    %c0_124 = arith.constant 0 : index
    %269 = vector.load %arg13[%c1_122, %c0_123, %c0_124] : memref<2x1x32xf32, #tpu.memory_space<vmem>>, vector<1x1x32xf32>
    %270 = vector.shape_cast %269 : vector<1x1x32xf32> to vector<1x32xf32>
    %271 = vector.broadcast %270 : vector<1x32xf32> to vector<16x32xf32>
    %272 = arith.addf %268, %271 : vector<16x32xf32>
    %c1_125 = arith.constant 1 : index
    %c0_126 = arith.constant 0 : index
    %c0_127 = arith.constant 0 : index
    %273 = vector.load %arg14[%c1_125, %c0_126, %c0_127] : memref<2x1x32xf32, #tpu.memory_space<vmem>>, vector<1x1x32xf32>
    %274 = vector.shape_cast %273 : vector<1x1x32xf32> to vector<1x32xf32>
    %c1_128 = arith.constant 1 : index
    %c0_129 = arith.constant 0 : index
    %c0_130 = arith.constant 0 : index
    %275 = vector.load %arg15[%c1_128, %c0_129, %c0_130] : memref<2x1x32xf32, #tpu.memory_space<vmem>>, vector<1x1x32xf32>
    %276 = vector.shape_cast %275 : vector<1x1x32xf32> to vector<1x32xf32>
    %cst_131 = arith.constant dense<0.000000e+00> : vector<16xf32>
    %277 = vector.multi_reduction <add>, %272, %cst_131 [1] : vector<16x32xf32> to vector<16xf32>
    %278 = vector.shape_cast %277 : vector<16xf32> to vector<16x1xf32>
    %cst_132 = arith.constant 3.200000e+01 : f32
    %279 = vector.broadcast %cst_132 : f32 to vector<16x1xf32>
    %280 = arith.divf %278, %279 : vector<16x1xf32>
    %281 = vector.broadcast %280 : vector<16x1xf32> to vector<16x32xf32>
    %282 = arith.subf %272, %281 : vector<16x32xf32>
    %283 = arith.mulf %282, %282 : vector<16x32xf32>
    %cst_133 = arith.constant dense<0.000000e+00> : vector<16xf32>
    %284 = vector.multi_reduction <add>, %283, %cst_133 [1] : vector<16x32xf32> to vector<16xf32>
    %285 = vector.shape_cast %284 : vector<16xf32> to vector<16x1xf32>
    %cst_134 = arith.constant 3.200000e+01 : f32
    %286 = vector.broadcast %cst_134 : f32 to vector<16x1xf32>
    %287 = arith.divf %285, %286 : vector<16x1xf32>
    %cst_135 = arith.constant 9.99999996E-13 : f32
    %288 = vector.broadcast %cst_135 : f32 to vector<16x1xf32>
    %289 = arith.addf %287, %288 : vector<16x1xf32>
    %290 = math.rsqrt %289 : vector<16x1xf32>
    %291 = vector.broadcast %290 : vector<16x1xf32> to vector<16x32xf32>
    %292 = arith.mulf %282, %291 : vector<16x32xf32>
    %293 = vector.broadcast %274 : vector<1x32xf32> to vector<16x32xf32>
    %294 = arith.mulf %292, %293 : vector<16x32xf32>
    %295 = vector.broadcast %276 : vector<1x32xf32> to vector<16x32xf32>
    %296 = arith.addf %294, %295 : vector<16x32xf32>
    %297 = vector.extract_strided_slice %296 {offsets = [0, 0], sizes = [1, 32], strides = [1, 1]} : vector<16x32xf32> to vector<1x32xf32>
    %298 = vector.extract_strided_slice %296 {offsets = [8, 0], sizes = [1, 32], strides = [1, 1]} : vector<16x32xf32> to vector<1x32xf32>
    %299 = tpu.concatenate %297, %298 in 0 : vector<1x32xf32>, vector<1x32xf32> -> vector<2x32xf32>
    %c0_136 = arith.constant 0 : index
    %c0_137 = arith.constant 0 : index
    %300 = vector.load %arg16[%c0_136, %c0_137] : memref<32x32xf32, #tpu.memory_space<vmem>>, vector<32x32xf32>
    %cst_138 = arith.constant dense<0.000000e+00> : vector<2x32xf32>
    %301 = tpu.matmul %299, %300, %cst_138 {dimension_numbers = #tpu.dot_dimension_numbers<[1], [0], [0], [1], [0, 0, 1, 1], [], []>} : vector<2x32xf32>, vector<32x32xf32>, vector<2x32xf32> -> vector<2x32xf32>
    %c0_139 = arith.constant 0 : index
    %c0_140 = arith.constant 0 : index
    %302 = vector.load %arg17[%c0_139, %c0_140] : memref<1x32xf32, #tpu.memory_space<vmem>>, vector<1x32xf32>
    %303 = vector.broadcast %302 : vector<1x32xf32> to vector<2x32xf32>
    %304 = arith.addf %301, %303 : vector<2x32xf32>
    %305 = math.tanh %304 : vector<2x32xf32>
    %c0_141 = arith.constant 0 : index
    %c0_142 = arith.constant 0 : index
    %306 = vector.load %arg18[%c0_141, %c0_142] : memref<32x128xf32, #tpu.memory_space<vmem>>, vector<32x128xf32>
    %cst_143 = arith.constant dense<0.000000e+00> : vector<2x128xf32>
    %307 = tpu.matmul %305, %306, %cst_143 {dimension_numbers = #tpu.dot_dimension_numbers<[1], [0], [0], [1], [0, 0, 1, 1], [], []>} : vector<2x32xf32>, vector<32x128xf32>, vector<2x128xf32> -> vector<2x128xf32>
    %c0_144 = arith.constant 0 : index
    %c0_145 = arith.constant 0 : index
    %308 = vector.load %arg19[%c0_144, %c0_145] : memref<1x128xf32, #tpu.memory_space<vmem>>, vector<1x128xf32>
    %309 = vector.broadcast %308 : vector<1x128xf32> to vector<2x128xf32>
    %310 = arith.addf %307, %309 : vector<2x128xf32>
    %c0_146 = arith.constant 0 : index
    %c0_147 = arith.constant 0 : index
    %311 = vector.load %arg20[%c0_146, %c0_147] : memref<2x128xf32, #tpu.memory_space<vmem>>, vector<2x128xf32>
    tpu.vector_store %arg20[%c0_146, %c0_147], %310 {strides = array<i32>} : memref<2x128xf32, #tpu.memory_space<vmem>>, vector<2x128xf32>,
    return
  }
}

</mosaic_0001>

<llo_original>
// kernel: bert_sentiment_forward.1
$region0: #{bert_sentiment_forward.1}
  #allocation0 [shape = 'u32[]', space=smem, size = 0x4, offset = 0x4, fixed_abs, tag = 'smem constant byte address 0x4 - core index']
  #allocation1 [shape = 'u32[72,128]{1,0:T(1,128)}', space=vmem, size = 0x9000, scoped, tag = 'internal scratch']
  %s0 = inlined_call_operand.vmem [shape: f32[16,32], index: 0, kind: input, shape index: {}]
  %s1 = inlined_call_operand.vmem [shape: f32[2,8], index: 1, kind: input, shape index: {}]
  %s2 = inlined_call_operand.vmem [shape: f32[1,32], index: 2, kind: input, shape index: {}]
  %s3 = inlined_call_operand.vmem [shape: f32[1,32], index: 3, kind: input, shape index: {}]
  %s4 = inlined_call_operand.vmem [shape: f32[2,32,96], index: 4, kind: input, shape index: {}]
  %s5 = inlined_call_operand.vmem [shape: f32[2,1,96], index: 5, kind: input, shape index: {}]
  %s6 = inlined_call_operand.vmem [shape: f32[2,32,32], index: 6, kind: input, shape index: {}]
  %s7 = inlined_call_operand.vmem [shape: f32[2,1,32], index: 7, kind: input, shape index: {}]
  %s8 = inlined_call_operand.vmem [shape: f32[2,1,32], index: 8, kind: input, shape index: {}]
  %s9 = inlined_call_operand.vmem [shape: f32[2,1,32], index: 9, kind: input, shape index: {}]
  %s10 = inlined_call_operand.vmem [shape: f32[2,32,64], index: 10, kind: input, shape index: {}]
  %s11 = inlined_call_operand.vmem [shape: f32[2,1,64], index: 11, kind: input, shape index: {}]
  %s12 = inlined_call_operand.vmem [shape: f32[2,64,32], index: 12, kind: input, shape index: {}]
  %s13 = inlined_call_operand.vmem [shape: f32[2,1,32], index: 13, kind: input, shape index: {}]
  %s14 = inlined_call_operand.vmem [shape: f32[2,1,32], index: 14, kind: input, shape index: {}]
  %s15 = inlined_call_operand.vmem [shape: f32[2,1,32], index: 15, kind: input, shape index: {}]
  %s16 = inlined_call_operand.vmem [shape: f32[32,32], index: 16, kind: input, shape index: {}]
  %s17 = inlined_call_operand.vmem [shape: f32[1,32], index: 17, kind: input, shape index: {}]
  %s18 = inlined_call_operand.vmem [shape: f32[32,128], index: 18, kind: input, shape index: {}]
  %s19 = inlined_call_operand.vmem [shape: f32[1,128], index: 19, kind: input, shape index: {}]
  %s20 = inlined_call_operand.hbm [shape: f32[2,128], index: 20, kind: output, shape index: {}]
  %s21 = sld [smem:[#allocation0]]
  $region90: #{bert_sentiment_forward.1} parent=0
    _
  %s23 = ssub.s32 1, %s21
  %s24 = scalar_select 0, %s23, %s21
  $region1: #{bert_sentiment_forward.1} parent=0
    #allocation2 [shape = 'u8[1024]{0}', space=vmem, size = 0x400, scoped, tag = 'output window, operand 0, single buffered']
    #allocation3 [shape = 's32[1]{0}', space=sflag, size = 0x4, scoped, tag = 'scoped memory for bert_sentiment_forward.1']
    %25 = vsyncpa [#allocation3], 0
    // Predicated region
    $region2: #{bert_sentiment_forward.1} parent=1 // pred_check
      _
    $region3: #{bert_sentiment_forward.1} parent=1 // pred_check_branch
      %27 = sbr.rel (0) target = $region5
    $region4: #{bert_sentiment_forward.1} parent=1 // pred_region
      _
    $region5: #{bert_sentiment_forward.1} parent=1 // pred_fallthru
      _
    // Predicated region
    $region6: #{bert_sentiment_forward.1} parent=1 // pred_check
      _
    $region7: #{bert_sentiment_forward.1} parent=1 // pred_check_branch
      %29 = sbr.rel (0) target = $region9
    $region8: #{bert_sentiment_forward.1} parent=1 // pred_region
      _
    $region9: #{bert_sentiment_forward.1} parent=1 // pred_fallthru
      _
    // Predicated region
    $region10: #{bert_sentiment_forward.1} parent=1 // pred_check
      _
    $region11: #{bert_sentiment_forward.1} parent=1 // pred_check_branch
      %31 = sbr.rel (0) target = $region13
    $region12: #{bert_sentiment_forward.1} parent=1 // pred_region
      _
    $region13: #{bert_sentiment_forward.1} parent=1 // pred_fallthru
      _
    // Predicated region
    $region14: #{bert_sentiment_forward.1} parent=1 // pred_check
      _
    $region15: #{bert_sentiment_forward.1} parent=1 // pred_check_branch
      %33 = sbr.rel (0) target = $region17
    $region16: #{bert_sentiment_forward.1} parent=1 // pred_region
      _
    $region17: #{bert_sentiment_forward.1} parent=1 // pred_fallthru
      _
    // Predicated region
    $region18: #{bert_sentiment_forward.1} parent=1 // pred_check
      _
    $region19: #{bert_sentiment_forward.1} parent=1 // pred_check_branch
      %35 = sbr.rel (0) target = $region21
    $region20: #{bert_sentiment_forward.1} parent=1 // pred_region
      _
    $region21: #{bert_sentiment_forward.1} parent=1 // pred_fallthru
      _
    // Predicated region
    $region22: #{bert_sentiment_forward.1} parent=1 // pred_check
      _
    $region23: #{bert_sentiment_forward.1} parent=1 // pred_check_branch
      %37 = sbr.rel (0) target = $region25
    $region24: #{bert_sentiment_forward.1} parent=1 // pred_region
      _
    $region25: #{bert_sentiment_forward.1} parent=1 // pred_fallthru
      _
    // Predicated region
    $region26: #{bert_sentiment_forward.1} parent=1 // pred_check
      _
    $region27: #{bert_sentiment_forward.1} parent=1 // pred_check_branch
      %39 = sbr.rel (0) target = $region29
    $region28: #{bert_sentiment_forward.1} parent=1 // pred_region
      _
    $region29: #{bert_sentiment_forward.1} parent=1 // pred_fallthru
      _
    // Predicated region
    $region30: #{bert_sentiment_forward.1} parent=1 // pred_check
      _
    $region31: #{bert_sentiment_forward.1} parent=1 // pred_check_branch
      %41 = sbr.rel (0) target = $region33
    $region32: #{bert_sentiment_forward.1} parent=1 // pred_region
      _
    $region33: #{bert_sentiment_forward.1} parent=1 // pred_fallthru
      _
    // Predicated region
    $region34: #{bert_sentiment_forward.1} parent=1 // pred_check
      _
    $region35: #{bert_sentiment_forward.1} parent=1 // pred_check_branch
      %43 = sbr.rel (0) target = $region37
    $region36: #{bert_sentiment_forward.1} parent=1 // pred_region
      _
    $region37: #{bert_sentiment_forward.1} parent=1 // pred_fallthru
      _
    // Predicated region
    $region38: #{bert_sentiment_forward.1} parent=1 // pred_check
      _
    $region39: #{bert_sentiment_forward.1} parent=1 // pred_check_branch
      %45 = sbr.rel (0) target = $region41
    $region40: #{bert_sentiment_forward.1} parent=1 // pred_region
      _
    $region41: #{bert_sentiment_forward.1} parent=1 // pred_fallthru
      _
    // Predicated region
    $region42: #{bert_sentiment_forward.1} parent=1 // pred_check
      _
    $region43: #{bert_sentiment_forward.1} parent=1 // pred_check_branch
      %47 = sbr.rel (0) target = $region45
    $region44: #{bert_sentiment_forward.1} parent=1 // pred_region
      _
    $region45: #{bert_sentiment_forward.1} parent=1 // pred_fallthru
      _
    // Predicated region
    $region46: #{bert_sentiment_forward.1} parent=1 // pred_check
      _
    $region47: #{bert_sentiment_forward.1} parent=1 // pred_check_branch
      %49 = sbr.rel (0) target = $region49
    $region48: #{bert_sentiment_forward.1} parent=1 // pred_region
      _
    $region49: #{bert_sentiment_forward.1} parent=1 // pred_fallthru
      _
    // Predicated region
    $region50: #{bert_sentiment_forward.1} parent=1 // pred_check
      _
    $region51: #{bert_sentiment_forward.1} parent=1 // pred_check_branch
      %51 = sbr.rel (0) target = $region53
    $region52: #{bert_sentiment_forward.1} parent=1 // pred_region
      _
    $region53: #{bert_sentiment_forward.1} parent=1 // pred_fallthru
      _
    // Predicated region
    $region54: #{bert_sentiment_forward.1} parent=1 // pred_check
      _
    $region55: #{bert_sentiment_forward.1} parent=1 // pred_check_branch
      %53 = sbr.rel (0) target = $region57
    $region56: #{bert_sentiment_forward.1} parent=1 // pred_region
      _
    $region57: #{bert_sentiment_forward.1} parent=1 // pred_fallthru
      _
    // Predicated region
    $region58: #{bert_sentiment_forward.1} parent=1 // pred_check
      _
    $region59: #{bert_sentiment_forward.1} parent=1 // pred_check_branch
      %55 = sbr.rel (0) target = $region61
    $region60: #{bert_sentiment_forward.1} parent=1 // pred_region
      _
    $region61: #{bert_sentiment_forward.1} parent=1 // pred_fallthru
      _
    // Predicated region
    $region62: #{bert_sentiment_forward.1} parent=1 // pred_check
      _
    $region63: #{bert_sentiment_forward.1} parent=1 // pred_check_branch
      %57 = sbr.rel (0) target = $region65
    $region64: #{bert_sentiment_forward.1} parent=1 // pred_region
      _
    $region65: #{bert_sentiment_forward.1} parent=1 // pred_fallthru
      _
    // Predicated region
    $region66: #{bert_sentiment_forward.1} parent=1 // pred_check
      _
    $region67: #{bert_sentiment_forward.1} parent=1 // pred_check_branch
      %59 = sbr.rel (0) target = $region69
    $region68: #{bert_sentiment_forward.1} parent=1 // pred_region
      _
    $region69: #{bert_sentiment_forward.1} parent=1 // pred_fallthru
      _
    // Predicated region
    $region70: #{bert_sentiment_forward.1} parent=1 // pred_check
      _
    $region71: #{bert_sentiment_forward.1} parent=1 // pred_check_branch
      %61 = sbr.rel (0) target = $region73
    $region72: #{bert_sentiment_forward.1} parent=1 // pred_region
      _
    $region73: #{bert_sentiment_forward.1} parent=1 // pred_fallthru
      _
    // Predicated region
    $region74: #{bert_sentiment_forward.1} parent=1 // pred_check
      _
    $region75: #{bert_sentiment_forward.1} parent=1 // pred_check_branch
      %63 = sbr.rel (0) target = $region77
    $region76: #{bert_sentiment_forward.1} parent=1 // pred_region
      _
    $region77: #{bert_sentiment_forward.1} parent=1 // pred_fallthru
      _
    // Predicated region
    $region78: #{bert_sentiment_forward.1} parent=1 // pred_check
      _
    $region79: #{bert_sentiment_forward.1} parent=1 // pred_check_branch
      %65 = sbr.rel (0) target = $region81
    $region80: #{bert_sentiment_forward.1} parent=1 // pred_region
      _
    $region81: #{bert_sentiment_forward.1} parent=1 // pred_fallthru
      _
    %v66 = vld [vmem:[%s1] sm:$0x3]
    %v67 = vsub.f32 1.0, %v66
    %v68 = vmul.f32 %v67, -10000.0
    %v70 = vrot.slane %v68, 1
    %v71 = vld [vmem:[%s0] sm:$0xff]
    %v72 = vld [vmem:[%s0 + $0x8] sm:$0xff]
    %v73 = vld [vmem:[%s2] sm:$0x1]
    %v74 = vld [vmem:[%s3] sm:$0x1]
    %vm75 = vcmask 261120
    %v76 = vsel %vm75, %v71, 0.0
    %77 = vadd.xlane.f32.xlu0 %v76
    %v78 = vpop.xlane.xlu0 %77
    %v79 = vsel %vm75, %v72, 0.0
    %80 = vadd.xlane.f32.xlu0 %v79
    %v81 = vpop.xlane.xlu0 %80
    %v82 = vrcp.pop 32.0
    %v83 = vmul.f32 32.0, %v82
    %v84 = vsub.f32 1.0, %v83
    %v85 = vmul.f32 %v82, %v84
    %v86 = vadd.f32 %v82, %v85
    %vm87 = vweird.f32 %v82
    %v88 = vsel %vm87, %v82, %v86
    %v89 = vmul.f32 %v78, %v88
    %v90 = vmul.f32 %v81, %v88
    %v91 = vsub.f32 %v71, %v89
    %v92 = vsub.f32 %v72, %v90
    %v93 = vmul.f32 %v91, %v91
    %v94 = vmul.f32 %v92, %v92
    %v95 = vsel %vm75, %v93, 0.0
    %96 = vadd.xlane.f32.xlu0 %v95
    %v97 = vpop.xlane.xlu0 %96
    %v98 = vsel %vm75, %v94, 0.0
    %99 = vadd.xlane.f32.xlu0 %v98
    %v100 = vpop.xlane.xlu0 %99
    %v101 = vmul.f32 %v97, %v88
    %v102 = vmul.f32 %v100, %v88
    %v103 = vadd.f32 %v101, 1e-12
    %v104 = vadd.f32 %v102, 1e-12
    %v105 = vrsqrt.pop %v103
    %v106 = vmul.f32 %v105, %v103
    %v107 = vmul.f32 %v106, %v105
    %v108 = vmul.f32 0.5, %v107
    %v109 = vsub.f32 1.5, %v108
    %v110 = vmul.f32 %v105, %v109
    %vm111 = vweird.f32 %v103
    %vm112 = vweird.f32 %v105
    %vm113 = vmor %vm111, %vm112
    %v114 = vsel %vm113, %v105, %v110
    %v115 = vrsqrt.pop %v104
    %v116 = vmul.f32 %v115, %v104
    %v117 = vmul.f32 %v116, %v115
    %v118 = vmul.f32 0.5, %v117
    %v119 = vsub.f32 1.5, %v118
    %v120 = vmul.f32 %v115, %v119
    %vm121 = vweird.f32 %v104
    %vm122 = vweird.f32 %v115
    %vm123 = vmor %vm121, %vm122
    %v124 = vsel %vm123, %v115, %v120
    %v125 = vmul.f32 %v91, %v114
    %v126 = vmul.f32 %v92, %v124
    %v128 = vperm.slane %v73, 0
    %v130 = vmul.f32 %v125, %v128
    %v131 = vmul.f32 %v126, %v128
    %v133 = vperm.slane %v74, 0
    %v135 = vadd.f32 %v130, %v133
    %v136 = vadd.f32 %v131, %v133
    %v137 = vld [vmem:[%s4] sm:$0xff]
    %v138 = vld [vmem:[%s4 + $0x8] sm:$0xff]
    %v139 = vld [vmem:[%s4 + $0x10] sm:$0xff]
    %v140 = vld [vmem:[%s4 + $0x18] sm:$0xff]
    %v141 = vld [vmem:[%s5] sm:$0x1]
    %v143 = vperm.slane %v141, 0
    %v146 = vsel %vm75, %v135, 0
    %v149 = vsel %vm75, %v136, 0
    %151 = vmatpush.msra.mxu0 0.0
    %152 = vmatpush.msra.mxu0 0.0
    %153 = vmatpush.msra.mxu0 0.0
    %154 = vmatpush.msra.mxu0 0.0
    %155 = vmatpush.msra.mxu0 0.0
    %156 = vmatpush.msra.mxu0 0.0
    %157 = vmatpush.msra.mxu0 0.0
    %158 = vmatpush.msra.mxu0 0.0
    %159 = vmatpush.msra.mxu0 0.0
    %160 = vmatpush.msra.mxu0 0.0
    %161 = vmatpush.msra.mxu0 0.0
    %162 = vmatpush.msra.mxu0 0.0
    %163 = vmatpush.msra.mxu0 %v140
    %164 = vmatpush.msra.mxu0 %v139
    %165 = vmatpush.msra.mxu0 %v138
    %166 = vmatpush.msra.mxu0 %v137
    %167 = vmatmul.f32.gmra.mxu0 %v146
    %v168 = vpop.f32.mrf.mxu0
    %v169 = vadd.f32 %v143, %v168
    %170 = vmatmul.f32.gmra.mxu0 %v149
    %v171 = vpop.f32.mrf.mxu0
    %v172 = vadd.f32 %v143, %v171
    %173 = vdwg.mxu0
    %v174 = vperm.slane %v68, 0
    %v175 = vperm.slane %v70, 0
    %179 = vrot.lane.b32.xlu0 %v169, 96
    %v180 = vpop.permute.xlu0 %179
    %vm181 = vcmask 130048
    %v182 = vsel %vm181, %v169, 0
    %v184 = vsel %vm181, %v180, 0
    %186 = vmatpush.xpose.msra.mxu0 0.0
    %187 = vmatpush.xpose.msra.mxu0 0.0
    %188 = vmatpush.xpose.msra.mxu0 0.0
    %189 = vmatpush.xpose.msra.mxu0 0.0
    %190 = vmatpush.xpose.msra.mxu0 0.0
    %191 = vmatpush.xpose.msra.mxu0 0.0
    %192 = vmatpush.xpose.msra.mxu0 0.0
    %193 = vmatpush.xpose.msra.mxu0 0.0
    %194 = vmatpush.xpose.msra.mxu0 0.0
    %195 = vmatpush.xpose.msra.mxu0 0.0
    %196 = vmatpush.xpose.msra.mxu0 0.0
    %197 = vmatpush.xpose.msra.mxu0 0.0
    %198 = vmatpush.xpose.msra.mxu0 0.0
    %199 = vmatpush.xpose.msra.mxu0 0.0
    %200 = vmatpush.xpose.msra.mxu0 0.0
    %201 = vmatpush.xpose.msra.mxu0 %v184
    %202 = vmatmul.f32.gmra.mxu0 %v182
    %v203 = vpop.f32.mrf.mxu0
    %v204 = vadd.f32 %v174, %v203
    %205 = vdwg.mxu0
    %207 = vrot.lane.b32.xlu0 %v172, 96
    %v208 = vpop.permute.xlu0 %207
    %v209 = vsel %vm181, %v172, 0
    %v211 = vsel %vm181, %v208, 0
    %213 = vmatpush.xpose.msra.mxu0 0.0
    %214 = vmatpush.xpose.msra.mxu0 0.0
    %215 = vmatpush.xpose.msra.mxu0 0.0
    %216 = vmatpush.xpose.msra.mxu0 0.0
    %217 = vmatpush.xpose.msra.mxu0 0.0
    %218 = vmatpush.xpose.msra.mxu0 0.0
    %219 = vmatpush.xpose.msra.mxu0 0.0
    %220 = vmatpush.xpose.msra.mxu0 0.0
    %221 = vmatpush.xpose.msra.mxu0 0.0
    %222 = vmatpush.xpose.msra.mxu0 0.0
    %223 = vmatpush.xpose.msra.mxu0 0.0
    %224 = vmatpush.xpose.msra.mxu0 0.0
    %225 = vmatpush.xpose.msra.mxu0 0.0
    %226 = vmatpush.xpose.msra.mxu0 0.0
    %227 = vmatpush.xpose.msra.mxu0 0.0
    %228 = vmatpush.xpose.msra.mxu0 %v211
    %229 = vmatmul.f32.gmra.mxu0 %v209
    %v230 = vpop.f32.mrf.mxu0
    %v231 = vadd.f32 %v175, %v230
    %232 = vdwg.mxu0
    %vm233 = vcmask 64512
    %v234 = vsel %vm233, %v204, -inf
    %235 = vmax.xlane.f32.xlu0 %v234
    %v236 = vpop.xlane.xlu0 %235
    %v237 = vsel %vm233, %v231, -inf
    %238 = vmax.xlane.f32.xlu0 %v237
    %v239 = vpop.xlane.xlu0 %238
    %v240 = vsub.f32 %v204, %v236
    %v241 = vsub.f32 %v231, %v239
    %v242 = vmul.f32 %v240, 1.442695
    %v243 = vpow.pop %v242
    %v244 = vmul.f32 %v241, 1.442695
    %v245 = vpow.pop %v244
    %v246 = vsel %vm233, %v243, 0.0
    %247 = vadd.xlane.f32.xlu0 %v246
    %v248 = vpop.xlane.xlu0 %247
    %v249 = vsel %vm233, %v245, 0.0
    %250 = vadd.xlane.f32.xlu0 %v249
    %v251 = vpop.xlane.xlu0 %250
    %v252 = vrcp.pop %v248
    %v253 = vrcp.pop %v251
    %v254 = vmul.f32 %v243, %v252
    %v255 = vmul.f32 %v245, %v253
    %256 = vrot.lane.b32.xlu0 %v169, 64
    %v257 = vpop.permute.xlu0 %256
    %v260 = vsel %vm233, %v254, 0
    %262 = vmatpush.msra.mxu0 0.0
    %263 = vmatpush.msra.mxu0 0.0
    %264 = vmatpush.msra.mxu0 0.0
    %265 = vmatpush.msra.mxu0 0.0
    %266 = vmatpush.msra.mxu0 0.0
    %267 = vmatpush.msra.mxu0 0.0
    %268 = vmatpush.msra.mxu0 0.0
    %269 = vmatpush.msra.mxu0 0.0
    %270 = vmatpush.msra.mxu0 0.0
    %271 = vmatpush.msra.mxu0 0.0
    %272 = vmatpush.msra.mxu0 0.0
    %273 = vmatpush.msra.mxu0 0.0
    %274 = vmatpush.msra.mxu0 0.0
    %275 = vmatpush.msra.mxu0 0.0
    %276 = vmatpush.msra.mxu0 0.0
    %277 = vmatpush.msra.mxu0 %v257
    %278 = vmatmul.f32.gmra.mxu0 %v260
    %v279 = vpop.f32.mrf.mxu0
    %v280 = vadd.f32 0.0, %v279
    %281 = vdwg.mxu0
    %282 = vrot.lane.b32.xlu0 %v172, 64
    %v283 = vpop.permute.xlu0 %282
    %v286 = vsel %vm233, %v255, 0
    %288 = vmatpush.msra.mxu0 0.0
    %289 = vmatpush.msra.mxu0 0.0
    %290 = vmatpush.msra.mxu0 0.0
    %291 = vmatpush.msra.mxu0 0.0
    %292 = vmatpush.msra.mxu0 0.0
    %293 = vmatpush.msra.mxu0 0.0
    %294 = vmatpush.msra.mxu0 0.0
    %295 = vmatpush.msra.mxu0 0.0
    %296 = vmatpush.msra.mxu0 0.0
    %297 = vmatpush.msra.mxu0 0.0
    %298 = vmatpush.msra.mxu0 0.0
    %299 = vmatpush.msra.mxu0 0.0
    %300 = vmatpush.msra.mxu0 0.0
    %301 = vmatpush.msra.mxu0 0.0
    %302 = vmatpush.msra.mxu0 0.0
    %303 = vmatpush.msra.mxu0 %v283
    %304 = vmatmul.f32.gmra.mxu0 %v286
    %v305 = vpop.f32.mrf.mxu0
    %v306 = vadd.f32 0.0, %v305
    %307 = vdwg.mxu0
    %308 = vrot.lane.b32.xlu0 %v169, 112
    %v309 = vpop.permute.xlu0 %308
    %310 = vrot.lane.b32.xlu0 %v169, 80
    %v311 = vpop.permute.xlu0 %310
    %v312 = vsel %vm181, %v309, 0
    %v314 = vsel %vm181, %v311, 0
    %316 = vmatpush.xpose.msra.mxu0 0.0
    %317 = vmatpush.xpose.msra.mxu0 0.0
    %318 = vmatpush.xpose.msra.mxu0 0.0
    %319 = vmatpush.xpose.msra.mxu0 0.0
    %320 = vmatpush.xpose.msra.mxu0 0.0
    %321 = vmatpush.xpose.msra.mxu0 0.0
    %322 = vmatpush.xpose.msra.mxu0 0.0
    %323 = vmatpush.xpose.msra.mxu0 0.0
    %324 = vmatpush.xpose.msra.mxu0 0.0
    %325 = vmatpush.xpose.msra.mxu0 0.0
    %326 = vmatpush.xpose.msra.mxu0 0.0
    %327 = vmatpush.xpose.msra.mxu0 0.0
    %328 = vmatpush.xpose.msra.mxu0 0.0
    %329 = vmatpush.xpose.msra.mxu0 0.0
    %330 = vmatpush.xpose.msra.mxu0 0.0
    %331 = vmatpush.xpose.msra.mxu0 %v314
    %332 = vmatmul.f32.gmra.mxu0 %v312
    %v333 = vpop.f32.mrf.mxu0
    %v334 = vadd.f32 %v174, %v333
    %335 = vdwg.mxu0
    %336 = vrot.lane.b32.xlu0 %v172, 112
    %v337 = vpop.permute.xlu0 %336
    %338 = vrot.lane.b32.xlu0 %v172, 80
    %v339 = vpop.permute.xlu0 %338
    %v340 = vsel %vm181, %v337, 0
    %v342 = vsel %vm181, %v339, 0
    %344 = vmatpush.xpose.msra.mxu0 0.0
    %345 = vmatpush.xpose.msra.mxu0 0.0
    %346 = vmatpush.xpose.msra.mxu0 0.0
    %347 = vmatpush.xpose.msra.mxu0 0.0
    %348 = vmatpush.xpose.msra.mxu0 0.0
    %349 = vmatpush.xpose.msra.mxu0 0.0
    %350 = vmatpush.xpose.msra.mxu0 0.0
    %351 = vmatpush.xpose.msra.mxu0 0.0
    %352 = vmatpush.xpose.msra.mxu0 0.0
    %353 = vmatpush.xpose.msra.mxu0 0.0
    %354 = vmatpush.xpose.msra.mxu0 0.0
    %355 = vmatpush.xpose.msra.mxu0 0.0
    %356 = vmatpush.xpose.msra.mxu0 0.0
    %357 = vmatpush.xpose.msra.mxu0 0.0
    %358 = vmatpush.xpose.msra.mxu0 0.0
    %359 = vmatpush.xpose.msra.mxu0 %v342
    %360 = vmatmul.f32.gmra.mxu0 %v340
    %v361 = vpop.f32.mrf.mxu0
    %v362 = vadd.f32 %v175, %v361
    %363 = vdwg.mxu0
    %v364 = vsel %vm233, %v334, -inf
    %365 = vmax.xlane.f32.xlu0 %v364
    %v366 = vpop.xlane.xlu0 %365
    %v367 = vsel %vm233, %v362, -inf
    %368 = vmax.xlane.f32.xlu0 %v367
    %v369 = vpop.xlane.xlu0 %368
    %v370 = vsub.f32 %v334, %v366
    %v371 = vsub.f32 %v362, %v369
    %v372 = vmul.f32 %v370, 1.442695
    %v373 = vpow.pop %v372
    %v374 = vmul.f32 %v371, 1.442695
    %v375 = vpow.pop %v374
    %v376 = vsel %vm233, %v373, 0.0
    %377 = vadd.xlane.f32.xlu0 %v376
    %v378 = vpop.xlane.xlu0 %377
    %v379 = vsel %vm233, %v375, 0.0
    %380 = vadd.xlane.f32.xlu0 %v379
    %v381 = vpop.xlane.xlu0 %380
    %v382 = vrcp.pop %v378
    %v383 = vrcp.pop %v381
    %v384 = vmul.f32 %v373, %v382
    %v385 = vmul.f32 %v375, %v383
    %386 = vrot.lane.b32.xlu0 %v169, 48
    %v387 = vpop.permute.xlu0 %386
    %v390 = vsel %vm233, %v384, 0
    %392 = vmatpush.msra.mxu0 0.0
    %393 = vmatpush.msra.mxu0 0.0
    %394 = vmatpush.msra.mxu0 0.0
    %395 = vmatpush.msra.mxu0 0.0
    %396 = vmatpush.msra.mxu0 0.0
    %397 = vmatpush.msra.mxu0 0.0
    %398 = vmatpush.msra.mxu0 0.0
    %399 = vmatpush.msra.mxu0 0.0
    %400 = vmatpush.msra.mxu0 0.0
    %401 = vmatpush.msra.mxu0 0.0
    %402 = vmatpush.msra.mxu0 0.0
    %403 = vmatpush.msra.mxu0 0.0
    %404 = vmatpush.msra.mxu0 0.0
    %405 = vmatpush.msra.mxu0 0.0
    %406 = vmatpush.msra.mxu0 0.0
    %407 = vmatpush.msra.mxu0 %v387
    %408 = vmatmul.f32.gmra.mxu0 %v390
    %v409 = vpop.f32.mrf.mxu0
    %v410 = vadd.f32 0.0, %v409
    %411 = vdwg.mxu0
    %412 = vrot.lane.b32.xlu0 %v172, 48
    %v413 = vpop.permute.xlu0 %412
    %v416 = vsel %vm233, %v385, 0
    %418 = vmatpush.msra.mxu0 0.0
    %419 = vmatpush.msra.mxu0 0.0
    %420 = vmatpush.msra.mxu0 0.0
    %421 = vmatpush.msra.mxu0 0.0
    %422 = vmatpush.msra.mxu0 0.0
    %423 = vmatpush.msra.mxu0 0.0
    %424 = vmatpush.msra.mxu0 0.0
    %425 = vmatpush.msra.mxu0 0.0
    %426 = vmatpush.msra.mxu0 0.0
    %427 = vmatpush.msra.mxu0 0.0
    %428 = vmatpush.msra.mxu0 0.0
    %429 = vmatpush.msra.mxu0 0.0
    %430 = vmatpush.msra.mxu0 0.0
    %431 = vmatpush.msra.mxu0 0.0
    %432 = vmatpush.msra.mxu0 0.0
    %433 = vmatpush.msra.mxu0 %v413
    %434 = vmatmul.f32.gmra.mxu0 %v416
    %v435 = vpop.f32.mrf.mxu0
    %v436 = vadd.f32 0.0, %v435
    %437 = vdwg.mxu0
    %440 = vrot.lane.b32.xlu0 %v410, 16
    %v441 = vpop.permute.xlu0 %440
    %442 = vrot.lane.b32.xlu0 %v436, 16
    %v443 = vpop.permute.xlu0 %442
    %v446 = vsel %vm181, %v280, %v441
    %v447 = vsel %vm181, %v306, %v443
    %v448 = vld [vmem:[%s6] sm:$0xff]
    %v449 = vld [vmem:[%s6 + $0x8] sm:$0xff]
    %v450 = vld [vmem:[%s6 + $0x10] sm:$0xff]
    %v451 = vld [vmem:[%s6 + $0x18] sm:$0xff]
    %v453 = vsel %vm75, %v446, 0
    %v456 = vsel %vm75, %v447, 0
    %458 = vmatpush.msra.mxu0 0.0
    %459 = vmatpush.msra.mxu0 0.0
    %460 = vmatpush.msra.mxu0 0.0
    %461 = vmatpush.msra.mxu0 0.0
    %462 = vmatpush.msra.mxu0 0.0
    %463 = vmatpush.msra.mxu0 0.0
    %464 = vmatpush.msra.mxu0 0.0
    %465 = vmatpush.msra.mxu0 0.0
    %466 = vmatpush.msra.mxu0 0.0
    %467 = vmatpush.msra.mxu0 0.0
    %468 = vmatpush.msra.mxu0 0.0
    %469 = vmatpush.msra.mxu0 0.0
    %470 = vmatpush.msra.mxu0 %v451
    %471 = vmatpush.msra.mxu0 %v450
    %472 = vmatpush.msra.mxu0 %v449
    %473 = vmatpush.msra.mxu0 %v448
    %474 = vmatmul.f32.gmra.mxu0 %v453
    %v475 = vpop.f32.mrf.mxu0
    %v476 = vadd.f32 0.0, %v475
    %477 = vmatmul.f32.gmra.mxu0 %v456
    %v478 = vpop.f32.mrf.mxu0
    %v479 = vadd.f32 0.0, %v478
    %480 = vdwg.mxu0
    %v481 = vadd.f32 %v135, %v476
    %v482 = vadd.f32 %v136, %v479
    %v483 = vld [vmem:[%s7] sm:$0x1]
    %v485 = vperm.slane %v483, 0
    %v487 = vadd.f32 %v481, %v485
    %v488 = vadd.f32 %v482, %v485
    %v489 = vld [vmem:[%s8] sm:$0x1]
    %v490 = vld [vmem:[%s9] sm:$0x1]
    %v491 = vsel %vm75, %v487, 0.0
    %492 = vadd.xlane.f32.xlu0 %v491
    %v493 = vpop.xlane.xlu0 %492
    %v494 = vsel %vm75, %v488, 0.0
    %495 = vadd.xlane.f32.xlu0 %v494
    %v496 = vpop.xlane.xlu0 %495
    %v497 = vmul.f32 %v493, %v88
    %v498 = vmul.f32 %v496, %v88
    %v499 = vsub.f32 %v487, %v497
    %v500 = vsub.f32 %v488, %v498
    %v501 = vmul.f32 %v499, %v499
    %v502 = vmul.f32 %v500, %v500
    %v503 = vsel %vm75, %v501, 0.0
    %504 = vadd.xlane.f32.xlu0 %v503
    %v505 = vpop.xlane.xlu0 %504
    %v506 = vsel %vm75, %v502, 0.0
    %507 = vadd.xlane.f32.xlu0 %v506
    %v508 = vpop.xlane.xlu0 %507
    %v509 = vmul.f32 %v505, %v88
    %v510 = vmul.f32 %v508, %v88
    %v511 = vadd.f32 %v509, 1e-12
    %v512 = vadd.f32 %v510, 1e-12
    %v513 = vrsqrt.pop %v511
    %v514 = vmul.f32 %v513, %v511
    %v515 = vmul.f32 %v514, %v513
    %v516 = vmul.f32 0.5, %v515
    %v517 = vsub.f32 1.5, %v516
    %v518 = vmul.f32 %v513, %v517
    %vm519 = vweird.f32 %v511
    %vm520 = vweird.f32 %v513
    %vm521 = vmor %vm519, %vm520
    %v522 = vsel %vm521, %v513, %v518
    %v523 = vrsqrt.pop %v512
    %v524 = vmul.f32 %v523, %v512
    %v525 = vmul.f32 %v524, %v523
    %v526 = vmul.f32 0.5, %v525
    %v527 = vsub.f32 1.5, %v526
    %v528 = vmul.f32 %v523, %v527
    %vm529 = vweird.f32 %v512
    %vm530 = vweird.f32 %v523
    %vm531 = vmor %vm529, %vm530
    %v532 = vsel %vm531, %v523, %v528
    %v533 = vmul.f32 %v499, %v522
    %v534 = vmul.f32 %v500, %v532
    %v536 = vperm.slane %v489, 0
    %v538 = vmul.f32 %v533, %v536
    %v539 = vmul.f32 %v534, %v536
    %v541 = vperm.slane %v490, 0
    %v543 = vadd.f32 %v538, %v541
    %v544 = vadd.f32 %v539, %v541
    %v545 = vld [vmem:[%s10] sm:$0xff]
    %v546 = vld [vmem:[%s10 + $0x8] sm:$0xff]
    %v547 = vld [vmem:[%s10 + $0x10] sm:$0xff]
    %v548 = vld [vmem:[%s10 + $0x18] sm:$0xff]
    %v549 = vld [vmem:[%s11] sm:$0x1]
    %v551 = vperm.slane %v549, 0
    %v554 = vsel %vm75, %v543, 0
    %v557 = vsel %vm75, %v544, 0
    %559 = vmatpush.msra.mxu0 0.0
    %560 = vmatpush.msra.mxu0 0.0
    %561 = vmatpush.msra.mxu0 0.0
    %562 = vmatpush.msra.mxu0 0.0
    %563 = vmatpush.msra.mxu0 0.0
    %564 = vmatpush.msra.mxu0 0.0
    %565 = vmatpush.msra.mxu0 0.0
    %566 = vmatpush.msra.mxu0 0.0
    %567 = vmatpush.msra.mxu0 0.0
    %568 = vmatpush.msra.mxu0 0.0
    %569 = vmatpush.msra.mxu0 0.0
    %570 = vmatpush.msra.mxu0 0.0
    %571 = vmatpush.msra.mxu0 %v548
    %572 = vmatpush.msra.mxu0 %v547
    %573 = vmatpush.msra.mxu0 %v546
    %574 = vmatpush.msra.mxu0 %v545
    %575 = vmatmul.f32.gmra.mxu0 %v554
    %v576 = vpop.f32.mrf.mxu0
    %v577 = vadd.f32 %v551, %v576
    %578 = vmatmul.f32.gmra.mxu0 %v557
    %v579 = vpop.f32.mrf.mxu0
    %v580 = vadd.f32 %v551, %v579
    %581 = vdwg.mxu0
    %v582 = vmul.f32 %v577, 0.5
    %v583 = vmul.f32 %v580, 0.5
    %v584 = vmul.f32 %v577, 0.044715
    %v585 = vmul.f32 %v580, 0.044715
    %v586 = vmul.f32 %v584, %v577
    %v587 = vmul.f32 %v585, %v580
    %v588 = vmul.f32 %v586, %v577
    %v589 = vmul.f32 %v587, %v580
    %v590 = vadd.f32 %v577, %v588
    %v591 = vadd.f32 %v580, %v589
    %v592 = vmul.f32 %v590, 0.7978846
    %v593 = vmul.f32 %v591, 0.7978846
    %v594 = vtanh.pop %v592
    %v595 = vtanh.pop %v593
    %v596 = vadd.f32 %v594, 1.0
    %v597 = vadd.f32 %v595, 1.0
    %v598 = vmul.f32 %v582, %v596
    %v599 = vmul.f32 %v583, %v597
    %v600 = vld [vmem:[%s12] sm:$0xff]
    %v601 = vld [vmem:[%s12 + $0x8] sm:$0xff]
    %v602 = vld [vmem:[%s12 + $0x10] sm:$0xff]
    %v603 = vld [vmem:[%s12 + $0x18] sm:$0xff]
    %v604 = vld [vmem:[%s12 + $0x20] sm:$0xff]
    %v605 = vld [vmem:[%s12 + $0x28] sm:$0xff]
    %v606 = vld [vmem:[%s12 + $0x30] sm:$0xff]
    %v607 = vld [vmem:[%s12 + $0x38] sm:$0xff]
    %vm608 = vcmask 523264
    %v610 = vsel %vm608, %v598, 0
    %v613 = vsel %vm608, %v599, 0
    %615 = vmatpush.msra.mxu0 0.0
    %616 = vmatpush.msra.mxu0 0.0
    %617 = vmatpush.msra.mxu0 0.0
    %618 = vmatpush.msra.mxu0 0.0
    %619 = vmatpush.msra.mxu0 0.0
    %620 = vmatpush.msra.mxu0 0.0
    %621 = vmatpush.msra.mxu0 0.0
    %622 = vmatpush.msra.mxu0 0.0
    %623 = vmatpush.msra.mxu0 %v607
    %624 = vmatpush.msra.mxu0 %v606
    %625 = vmatpush.msra.mxu0 %v605
    %626 = vmatpush.msra.mxu0 %v604
    %627 = vmatpush.msra.mxu0 %v603
    %628 = vmatpush.msra.mxu0 %v602
    %629 = vmatpush.msra.mxu0 %v601
    %630 = vmatpush.msra.mxu0 %v600
    %631 = vmatmul.f32.gmra.mxu0 %v610
    %v632 = vpop.f32.mrf.mxu0
    %v633 = vadd.f32 0.0, %v632
    %634 = vmatmul.f32.gmra.mxu0 %v613
    %v635 = vpop.f32.mrf.mxu0
    %v636 = vadd.f32 0.0, %v635
    %637 = vdwg.mxu0
    %v638 = vadd.f32 %v543, %v633
    %v639 = vadd.f32 %v544, %v636
    %v640 = vld [vmem:[%s13] sm:$0x1]
    %v642 = vperm.slane %v640, 0
    %v644 = vadd.f32 %v638, %v642
    %v645 = vadd.f32 %v639, %v642
    %v646 = vld [vmem:[%s14] sm:$0x1]
    %v647 = vld [vmem:[%s15] sm:$0x1]
    %v648 = vsel %vm75, %v644, 0.0
    %649 = vadd.xlane.f32.xlu0 %v648
    %v650 = vpop.xlane.xlu0 %649
    %v651 = vsel %vm75, %v645, 0.0
    %652 = vadd.xlane.f32.xlu0 %v651
    %v653 = vpop.xlane.xlu0 %652
    %v654 = vmul.f32 %v650, %v88
    %v655 = vmul.f32 %v653, %v88
    %v656 = vsub.f32 %v644, %v654
    %v657 = vsub.f32 %v645, %v655
    %v658 = vmul.f32 %v656, %v656
    %v659 = vmul.f32 %v657, %v657
    %v660 = vsel %vm75, %v658, 0.0
    %661 = vadd.xlane.f32.xlu0 %v660
    %v662 = vpop.xlane.xlu0 %661
    %v663 = vsel %vm75, %v659, 0.0
    %664 = vadd.xlane.f32.xlu0 %v663
    %v665 = vpop.xlane.xlu0 %664
    %v666 = vmul.f32 %v662, %v88
    %v667 = vmul.f32 %v665, %v88
    %v668 = vadd.f32 %v666, 1e-12
    %v669 = vadd.f32 %v667, 1e-12
    %v670 = vrsqrt.pop %v668
    %v671 = vmul.f32 %v670, %v668
    %v672 = vmul.f32 %v671, %v670
    %v673 = vmul.f32 0.5, %v672
    %v674 = vsub.f32 1.5, %v673
    %v675 = vmul.f32 %v670, %v674
    %vm676 = vweird.f32 %v668
    %vm677 = vweird.f32 %v670
    %vm678 = vmor %vm676, %vm677
    %v679 = vsel %vm678, %v670, %v675
    %v680 = vrsqrt.pop %v669
    %v681 = vmul.f32 %v680, %v669
    %v682 = vmul.f32 %v681, %v680
    %v683 = vmul.f32 0.5, %v682
    %v684 = vsub.f32 1.5, %v683
    %v685 = vmul.f32 %v680, %v684
    %vm686 = vweird.f32 %v669
    %vm687 = vweird.f32 %v680
    %vm688 = vmor %vm686, %vm687
    %v689 = vsel %vm688, %v680, %v685
    %v690 = vmul.f32 %v656, %v679
    %v691 = vmul.f32 %v657, %v689
    %v693 = vperm.slane %v646, 0
    %v695 = vmul.f32 %v690, %v693
    %v696 = vmul.f32 %v691, %v693
    %v698 = vperm.slane %v647, 0
    %v700 = vadd.f32 %v695, %v698
    %v701 = vadd.f32 %v696, %v698
    %s702 = scalar_lea.vmem %s4, 32
    %v703 = vld [vmem:[%s702] sm:$0xff]
    %v704 = vld [vmem:[%s702 + $0x8] sm:$0xff]
    %v705 = vld [vmem:[%s702 + $0x10] sm:$0xff]
    %v706 = vld [vmem:[%s702 + $0x18] sm:$0xff]
    %s707 = scalar_lea.vmem %s5, 1
    %v708 = vld [vmem:[%s707] sm:$0x1]
    %v710 = vperm.slane %v708, 0
    %v713 = vsel %vm75, %v700, 0
    %v716 = vsel %vm75, %v701, 0
    %718 = vmatpush.msra.mxu0 0.0
    %719 = vmatpush.msra.mxu0 0.0
    %720 = vmatpush.msra.mxu0 0.0
    %721 = vmatpush.msra.mxu0 0.0
    %722 = vmatpush.msra.mxu0 0.0
    %723 = vmatpush.msra.mxu0 0.0
    %724 = vmatpush.msra.mxu0 0.0
    %725 = vmatpush.msra.mxu0 0.0
    %726 = vmatpush.msra.mxu0 0.0
    %727 = vmatpush.msra.mxu0 0.0
    %728 = vmatpush.msra.mxu0 0.0
    %729 = vmatpush.msra.mxu0 0.0
    %730 = vmatpush.msra.mxu0 %v706
    %731 = vmatpush.msra.mxu0 %v705
    %732 = vmatpush.msra.mxu0 %v704
    %733 = vmatpush.msra.mxu0 %v703
    %734 = vmatmul.f32.gmra.mxu0 %v713
    %v735 = vpop.f32.mrf.mxu0
    %v736 = vadd.f32 %v710, %v735
    %737 = vmatmul.f32.gmra.mxu0 %v716
    %v738 = vpop.f32.mrf.mxu0
    %v739 = vadd.f32 %v710, %v738
    %740 = vdwg.mxu0
    %742 = vrot.lane.b32.xlu0 %v736, 96
    %v743 = vpop.permute.xlu0 %742
    %v744 = vsel %vm181, %v736, 0
    %v746 = vsel %vm181, %v743, 0
    %748 = vmatpush.xpose.msra.mxu0 0.0
    %749 = vmatpush.xpose.msra.mxu0 0.0
    %750 = vmatpush.xpose.msra.mxu0 0.0
    %751 = vmatpush.xpose.msra.mxu0 0.0
    %752 = vmatpush.xpose.msra.mxu0 0.0
    %753 = vmatpush.xpose.msra.mxu0 0.0
    %754 = vmatpush.xpose.msra.mxu0 0.0
    %755 = vmatpush.xpose.msra.mxu0 0.0
    %756 = vmatpush.xpose.msra.mxu0 0.0
    %757 = vmatpush.xpose.msra.mxu0 0.0
    %758 = vmatpush.xpose.msra.mxu0 0.0
    %759 = vmatpush.xpose.msra.mxu0 0.0
    %760 = vmatpush.xpose.msra.mxu0 0.0
    %761 = vmatpush.xpose.msra.mxu0 0.0
    %762 = vmatpush.xpose.msra.mxu0 0.0
    %763 = vmatpush.xpose.msra.mxu0 %v746
    %764 = vmatmul.f32.gmra.mxu0 %v744
    %v765 = vpop.f32.mrf.mxu0
    %v766 = vadd.f32 %v174, %v765
    %767 = vdwg.mxu0
    %769 = vrot.lane.b32.xlu0 %v739, 96
    %v770 = vpop.permute.xlu0 %769
    %v771 = vsel %vm181, %v739, 0
    %v773 = vsel %vm181, %v770, 0
    %775 = vmatpush.xpose.msra.mxu0 0.0
    %776 = vmatpush.xpose.msra.mxu0 0.0
    %777 = vmatpush.xpose.msra.mxu0 0.0
    %778 = vmatpush.xpose.msra.mxu0 0.0
    %779 = vmatpush.xpose.msra.mxu0 0.0
    %780 = vmatpush.xpose.msra.mxu0 0.0
    %781 = vmatpush.xpose.msra.mxu0 0.0
    %782 = vmatpush.xpose.msra.mxu0 0.0
    %783 = vmatpush.xpose.msra.mxu0 0.0
    %784 = vmatpush.xpose.msra.mxu0 0.0
    %785 = vmatpush.xpose.msra.mxu0 0.0
    %786 = vmatpush.xpose.msra.mxu0 0.0
    %787 = vmatpush.xpose.msra.mxu0 0.0
    %788 = vmatpush.xpose.msra.mxu0 0.0
    %789 = vmatpush.xpose.msra.mxu0 0.0
    %790 = vmatpush.xpose.msra.mxu0 %v773
    %791 = vmatmul.f32.gmra.mxu0 %v771
    %v792 = vpop.f32.mrf.mxu0
    %v793 = vadd.f32 %v175, %v792
    %794 = vdwg.mxu0
    %v795 = vsel %vm233, %v766, -inf
    %796 = vmax.xlane.f32.xlu0 %v795
    %v797 = vpop.xlane.xlu0 %796
    %v798 = vsel %vm233, %v793, -inf
    %799 = vmax.xlane.f32.xlu0 %v798
    %v800 = vpop.xlane.xlu0 %799
    %v801 = vsub.f32 %v766, %v797
    %v802 = vsub.f32 %v793, %v800
    %v803 = vmul.f32 %v801, 1.442695
    %v804 = vpow.pop %v803
    %v805 = vmul.f32 %v802, 1.442695
    %v806 = vpow.pop %v805
    %v807 = vsel %vm233, %v804, 0.0
    %808 = vadd.xlane.f32.xlu0 %v807
    %v809 = vpop.xlane.xlu0 %808
    %v810 = vsel %vm233, %v806, 0.0
    %811 = vadd.xlane.f32.xlu0 %v810
    %v812 = vpop.xlane.xlu0 %811
    %v813 = vrcp.pop %v809
    %v814 = vrcp.pop %v812
    %v815 = vmul.f32 %v804, %v813
    %v816 = vmul.f32 %v806, %v814
    %817 = vrot.lane.b32.xlu0 %v736, 64
    %v818 = vpop.permute.xlu0 %817
    %v821 = vsel %vm233, %v815, 0
    %823 = vmatpush.msra.mxu0 0.0
    %824 = vmatpush.msra.mxu0 0.0
    %825 = vmatpush.msra.mxu0 0.0
    %826 = vmatpush.msra.mxu0 0.0
    %827 = vmatpush.msra.mxu0 0.0
    %828 = vmatpush.msra.mxu0 0.0
    %829 = vmatpush.msra.mxu0 0.0
    %830 = vmatpush.msra.mxu0 0.0
    %831 = vmatpush.msra.mxu0 0.0
    %832 = vmatpush.msra.mxu0 0.0
    %833 = vmatpush.msra.mxu0 0.0
    %834 = vmatpush.msra.mxu0 0.0
    %835 = vmatpush.msra.mxu0 0.0
    %836 = vmatpush.msra.mxu0 0.0
    %837 = vmatpush.msra.mxu0 0.0
    %838 = vmatpush.msra.mxu0 %v818
    %839 = vmatmul.f32.gmra.mxu0 %v821
    %v840 = vpop.f32.mrf.mxu0
    %v841 = vadd.f32 0.0, %v840
    %842 = vdwg.mxu0
    %843 = vrot.lane.b32.xlu0 %v739, 64
    %v844 = vpop.permute.xlu0 %843
    %v847 = vsel %vm233, %v816, 0
    %849 = vmatpush.msra.mxu0 0.0
    %850 = vmatpush.msra.mxu0 0.0
    %851 = vmatpush.msra.mxu0 0.0
    %852 = vmatpush.msra.mxu0 0.0
    %853 = vmatpush.msra.mxu0 0.0
    %854 = vmatpush.msra.mxu0 0.0
    %855 = vmatpush.msra.mxu0 0.0
    %856 = vmatpush.msra.mxu0 0.0
    %857 = vmatpush.msra.mxu0 0.0
    %858 = vmatpush.msra.mxu0 0.0
    %859 = vmatpush.msra.mxu0 0.0
    %860 = vmatpush.msra.mxu0 0.0
    %861 = vmatpush.msra.mxu0 0.0
    %862 = vmatpush.msra.mxu0 0.0
    %863 = vmatpush.msra.mxu0 0.0
    %864 = vmatpush.msra.mxu0 %v844
    %865 = vmatmul.f32.gmra.mxu0 %v847
    %v866 = vpop.f32.mrf.mxu0
    %v867 = vadd.f32 0.0, %v866
    %868 = vdwg.mxu0
    %869 = vrot.lane.b32.xlu0 %v736, 112
    %v870 = vpop.permute.xlu0 %869
    %871 = vrot.lane.b32.xlu0 %v736, 80
    %v872 = vpop.permute.xlu0 %871
    %v873 = vsel %vm181, %v870, 0
    %v875 = vsel %vm181, %v872, 0
    %877 = vmatpush.xpose.msra.mxu0 0.0
    %878 = vmatpush.xpose.msra.mxu0 0.0
    %879 = vmatpush.xpose.msra.mxu0 0.0
    %880 = vmatpush.xpose.msra.mxu0 0.0
    %881 = vmatpush.xpose.msra.mxu0 0.0
    %882 = vmatpush.xpose.msra.mxu0 0.0
    %883 = vmatpush.xpose.msra.mxu0 0.0
    %884 = vmatpush.xpose.msra.mxu0 0.0
    %885 = vmatpush.xpose.msra.mxu0 0.0
    %886 = vmatpush.xpose.msra.mxu0 0.0
    %887 = vmatpush.xpose.msra.mxu0 0.0
    %888 = vmatpush.xpose.msra.mxu0 0.0
    %889 = vmatpush.xpose.msra.mxu0 0.0
    %890 = vmatpush.xpose.msra.mxu0 0.0
    %891 = vmatpush.xpose.msra.mxu0 0.0
    %892 = vmatpush.xpose.msra.mxu0 %v875
    %893 = vmatmul.f32.gmra.mxu0 %v873
    %v894 = vpop.f32.mrf.mxu0
    %v895 = vadd.f32 %v174, %v894
    %896 = vdwg.mxu0
    %897 = vrot.lane.b32.xlu0 %v739, 112
    %v898 = vpop.permute.xlu0 %897
    %899 = vrot.lane.b32.xlu0 %v739, 80
    %v900 = vpop.permute.xlu0 %899
    %v901 = vsel %vm181, %v898, 0
    %v903 = vsel %vm181, %v900, 0
    %905 = vmatpush.xpose.msra.mxu0 0.0
    %906 = vmatpush.xpose.msra.mxu0 0.0
    %907 = vmatpush.xpose.msra.mxu0 0.0
    %908 = vmatpush.xpose.msra.mxu0 0.0
    %909 = vmatpush.xpose.msra.mxu0 0.0
    %910 = vmatpush.xpose.msra.mxu0 0.0
    %911 = vmatpush.xpose.msra.mxu0 0.0
    %912 = vmatpush.xpose.msra.mxu0 0.0
    %913 = vmatpush.xpose.msra.mxu0 0.0
    %914 = vmatpush.xpose.msra.mxu0 0.0
    %915 = vmatpush.xpose.msra.mxu0 0.0
    %916 = vmatpush.xpose.msra.mxu0 0.0
    %917 = vmatpush.xpose.msra.mxu0 0.0
    %918 = vmatpush.xpose.msra.mxu0 0.0
    %919 = vmatpush.xpose.msra.mxu0 0.0
    %920 = vmatpush.xpose.msra.mxu0 %v903
    %921 = vmatmul.f32.gmra.mxu0 %v901
    %v922 = vpop.f32.mrf.mxu0
    %v923 = vadd.f32 %v175, %v922
    %924 = vdwg.mxu0
    %v925 = vsel %vm233, %v895, -inf
    %926 = vmax.xlane.f32.xlu0 %v925
    %v927 = vpop.xlane.xlu0 %926
    %v928 = vsel %vm233, %v923, -inf
    %929 = vmax.xlane.f32.xlu0 %v928
    %v930 = vpop.xlane.xlu0 %929
    %v931 = vsub.f32 %v895, %v927
    %v932 = vsub.f32 %v923, %v930
    %v933 = vmul.f32 %v931, 1.442695
    %v934 = vpow.pop %v933
    %v935 = vmul.f32 %v932, 1.442695
    %v936 = vpow.pop %v935
    %v937 = vsel %vm233, %v934, 0.0
    %938 = vadd.xlane.f32.xlu0 %v937
    %v939 = vpop.xlane.xlu0 %938
    %v940 = vsel %vm233, %v936, 0.0
    %941 = vadd.xlane.f32.xlu0 %v940
    %v942 = vpop.xlane.xlu0 %941
    %v943 = vrcp.pop %v939
    %v944 = vrcp.pop %v942
    %v945 = vmul.f32 %v934, %v943
    %v946 = vmul.f32 %v936, %v944
    %947 = vrot.lane.b32.xlu0 %v736, 48
    %v948 = vpop.permute.xlu0 %947
    %v951 = vsel %vm233, %v945, 0
    %953 = vmatpush.msra.mxu0 0.0
    %954 = vmatpush.msra.mxu0 0.0
    %955 = vmatpush.msra.mxu0 0.0
    %956 = vmatpush.msra.mxu0 0.0
    %957 = vmatpush.msra.mxu0 0.0
    %958 = vmatpush.msra.mxu0 0.0
    %959 = vmatpush.msra.mxu0 0.0
    %960 = vmatpush.msra.mxu0 0.0
    %961 = vmatpush.msra.mxu0 0.0
    %962 = vmatpush.msra.mxu0 0.0
    %963 = vmatpush.msra.mxu0 0.0
    %964 = vmatpush.msra.mxu0 0.0
    %965 = vmatpush.msra.mxu0 0.0
    %966 = vmatpush.msra.mxu0 0.0
    %967 = vmatpush.msra.mxu0 0.0
    %968 = vmatpush.msra.mxu0 %v948
    %969 = vmatmul.f32.gmra.mxu0 %v951
    %v970 = vpop.f32.mrf.mxu0
    %v971 = vadd.f32 0.0, %v970
    %972 = vdwg.mxu0
    %973 = vrot.lane.b32.xlu0 %v739, 48
    %v974 = vpop.permute.xlu0 %973
    %v977 = vsel %vm233, %v946, 0
    %979 = vmatpush.msra.mxu0 0.0
    %980 = vmatpush.msra.mxu0 0.0
    %981 = vmatpush.msra.mxu0 0.0
    %982 = vmatpush.msra.mxu0 0.0
    %983 = vmatpush.msra.mxu0 0.0
    %984 = vmatpush.msra.mxu0 0.0
    %985 = vmatpush.msra.mxu0 0.0
    %986 = vmatpush.msra.mxu0 0.0
    %987 = vmatpush.msra.mxu0 0.0
    %988 = vmatpush.msra.mxu0 0.0
    %989 = vmatpush.msra.mxu0 0.0
    %990 = vmatpush.msra.mxu0 0.0
    %991 = vmatpush.msra.mxu0 0.0
    %992 = vmatpush.msra.mxu0 0.0
    %993 = vmatpush.msra.mxu0 0.0
    %994 = vmatpush.msra.mxu0 %v974
    %995 = vmatmul.f32.gmra.mxu0 %v977
    %v996 = vpop.f32.mrf.mxu0
    %v997 = vadd.f32 0.0, %v996
    %998 = vdwg.mxu0
    %1001 = vrot.lane.b32.xlu0 %v971, 16
    %v1002 = vpop.permute.xlu0 %1001
    %1003 = vrot.lane.b32.xlu0 %v997, 16
    %v1004 = vpop.permute.xlu0 %1003
    %v1007 = vsel %vm181, %v841, %v1002
    %v1008 = vsel %vm181, %v867, %v1004
    %s1009 = scalar_lea.vmem %s6, 32
    %v1010 = vld [vmem:[%s1009] sm:$0xff]
    %v1011 = vld [vmem:[%s1009 + $0x8] sm:$0xff]
    %v1012 = vld [vmem:[%s1009 + $0x10] sm:$0xff]
    %v1013 = vld [vmem:[%s1009 + $0x18] sm:$0xff]
    %v1015 = vsel %vm75, %v1007, 0
    %v1018 = vsel %vm75, %v1008, 0
    %1020 = vmatpush.msra.mxu0 0.0
    %1021 = vmatpush.msra.mxu0 0.0
    %1022 = vmatpush.msra.mxu0 0.0
    %1023 = vmatpush.msra.mxu0 0.0
    %1024 = vmatpush.msra.mxu0 0.0
    %1025 = vmatpush.msra.mxu0 0.0
    %1026 = vmatpush.msra.mxu0 0.0
    %1027 = vmatpush.msra.mxu0 0.0
    %1028 = vmatpush.msra.mxu0 0.0
    %1029 = vmatpush.msra.mxu0 0.0
    %1030 = vmatpush.msra.mxu0 0.0
    %1031 = vmatpush.msra.mxu0 0.0
    %1032 = vmatpush.msra.mxu0 %v1013
    %1033 = vmatpush.msra.mxu0 %v1012
    %1034 = vmatpush.msra.mxu0 %v1011
    %1035 = vmatpush.msra.mxu0 %v1010
    %1036 = vmatmul.f32.gmra.mxu0 %v1015
    %v1037 = vpop.f32.mrf.mxu0
    %v1038 = vadd.f32 0.0, %v1037
    %1039 = vmatmul.f32.gmra.mxu0 %v1018
    %v1040 = vpop.f32.mrf.mxu0
    %v1041 = vadd.f32 0.0, %v1040
    %1042 = vdwg.mxu0
    %v1043 = vadd.f32 %v700, %v1038
    %v1044 = vadd.f32 %v701, %v1041
    %s1045 = scalar_lea.vmem %s7, 1
    %v1046 = vld [vmem:[%s1045] sm:$0x1]
    %v1048 = vperm.slane %v1046, 0
    %v1050 = vadd.f32 %v1043, %v1048
    %v1051 = vadd.f32 %v1044, %v1048
    %s1052 = scalar_lea.vmem %s8, 1
    %v1053 = vld [vmem:[%s1052] sm:$0x1]
    %s1054 = scalar_lea.vmem %s9, 1
    %v1055 = vld [vmem:[%s1054] sm:$0x1]
    %v1056 = vsel %vm75, %v1050, 0.0
    %1057 = vadd.xlane.f32.xlu0 %v1056
    %v1058 = vpop.xlane.xlu0 %1057
    %v1059 = vsel %vm75, %v1051, 0.0
    %1060 = vadd.xlane.f32.xlu0 %v1059
    %v1061 = vpop.xlane.xlu0 %1060
    %v1062 = vmul.f32 %v1058, %v88
    %v1063 = vmul.f32 %v1061, %v88
    %v1064 = vsub.f32 %v1050, %v1062
    %v1065 = vsub.f32 %v1051, %v1063
    %v1066 = vmul.f32 %v1064, %v1064
    %v1067 = vmul.f32 %v1065, %v1065
    %v1068 = vsel %vm75, %v1066, 0.0
    %1069 = vadd.xlane.f32.xlu0 %v1068
    %v1070 = vpop.xlane.xlu0 %1069
    %v1071 = vsel %vm75, %v1067, 0.0
    %1072 = vadd.xlane.f32.xlu0 %v1071
    %v1073 = vpop.xlane.xlu0 %1072
    %v1074 = vmul.f32 %v1070, %v88
    %v1075 = vmul.f32 %v1073, %v88
    %v1076 = vadd.f32 %v1074, 1e-12
    %v1077 = vadd.f32 %v1075, 1e-12
    %v1078 = vrsqrt.pop %v1076
    %v1079 = vmul.f32 %v1078, %v1076
    %v1080 = vmul.f32 %v1079, %v1078
    %v1081 = vmul.f32 0.5, %v1080
    %v1082 = vsub.f32 1.5, %v1081
    %v1083 = vmul.f32 %v1078, %v1082
    %vm1084 = vweird.f32 %v1076
    %vm1085 = vweird.f32 %v1078
    %vm1086 = vmor %vm1084, %vm1085
    %v1087 = vsel %vm1086, %v1078, %v1083
    %v1088 = vrsqrt.pop %v1077
    %v1089 = vmul.f32 %v1088, %v1077
    %v1090 = vmul.f32 %v1089, %v1088
    %v1091 = vmul.f32 0.5, %v1090
    %v1092 = vsub.f32 1.5, %v1091
    %v1093 = vmul.f32 %v1088, %v1092
    %vm1094 = vweird.f32 %v1077
    %vm1095 = vweird.f32 %v1088
    %vm1096 = vmor %vm1094, %vm1095
    %v1097 = vsel %vm1096, %v1088, %v1093
    %v1098 = vmul.f32 %v1064, %v1087
    %v1099 = vmul.f32 %v1065, %v1097
    %v1101 = vperm.slane %v1053, 0
    %v1103 = vmul.f32 %v1098, %v1101
    %v1104 = vmul.f32 %v1099, %v1101
    %v1106 = vperm.slane %v1055, 0
    %v1108 = vadd.f32 %v1103, %v1106
    %v1109 = vadd.f32 %v1104, %v1106
    %s1110 = scalar_lea.vmem %s10, 32
    %v1111 = vld [vmem:[%s1110] sm:$0xff]
    %v1112 = vld [vmem:[%s1110 + $0x8] sm:$0xff]
    %v1113 = vld [vmem:[%s1110 + $0x10] sm:$0xff]
    %v1114 = vld [vmem:[%s1110 + $0x18] sm:$0xff]
    %s1115 = scalar_lea.vmem %s11, 1
    %v1116 = vld [vmem:[%s1115] sm:$0x1]
    %v1118 = vperm.slane %v1116, 0
    %v1121 = vsel %vm75, %v1108, 0
    %v1124 = vsel %vm75, %v1109, 0
    %1126 = vmatpush.msra.mxu0 0.0
    %1127 = vmatpush.msra.mxu0 0.0
    %1128 = vmatpush.msra.mxu0 0.0
    %1129 = vmatpush.msra.mxu0 0.0
    %1130 = vmatpush.msra.mxu0 0.0
    %1131 = vmatpush.msra.mxu0 0.0
    %1132 = vmatpush.msra.mxu0 0.0
    %1133 = vmatpush.msra.mxu0 0.0
    %1134 = vmatpush.msra.mxu0 0.0
    %1135 = vmatpush.msra.mxu0 0.0
    %1136 = vmatpush.msra.mxu0 0.0
    %1137 = vmatpush.msra.mxu0 0.0
    %1138 = vmatpush.msra.mxu0 %v1114
    %1139 = vmatpush.msra.mxu0 %v1113
    %1140 = vmatpush.msra.mxu0 %v1112
    %1141 = vmatpush.msra.mxu0 %v1111
    %1142 = vmatmul.f32.gmra.mxu0 %v1121
    %v1143 = vpop.f32.mrf.mxu0
    %v1144 = vadd.f32 %v1118, %v1143
    %1145 = vmatmul.f32.gmra.mxu0 %v1124
    %v1146 = vpop.f32.mrf.mxu0
    %v1147 = vadd.f32 %v1118, %v1146
    %1148 = vdwg.mxu0
    %v1149 = vmul.f32 %v1144, 0.5
    %v1150 = vmul.f32 %v1147, 0.5
    %v1151 = vmul.f32 %v1144, 0.044715
    %v1152 = vmul.f32 %v1147, 0.044715
    %v1153 = vmul.f32 %v1151, %v1144
    %v1154 = vmul.f32 %v1152, %v1147
    %v1155 = vmul.f32 %v1153, %v1144
    %v1156 = vmul.f32 %v1154, %v1147
    %v1157 = vadd.f32 %v1144, %v1155
    %v1158 = vadd.f32 %v1147, %v1156
    %v1159 = vmul.f32 %v1157, 0.7978846
    %v1160 = vmul.f32 %v1158, 0.7978846
    %v1161 = vtanh.pop %v1159
    %v1162 = vtanh.pop %v1160
    %v1163 = vadd.f32 %v1161, 1.0
    %v1164 = vadd.f32 %v1162, 1.0
    %v1165 = vmul.f32 %v1149, %v1163
    %v1166 = vmul.f32 %v1150, %v1164
    %s1167 = scalar_lea.vmem %s12, 64
    %v1168 = vld [vmem:[%s1167] sm:$0xff]
    %v1169 = vld [vmem:[%s1167 + $0x8] sm:$0xff]
    %v1170 = vld [vmem:[%s1167 + $0x10] sm:$0xff]
    %v1171 = vld [vmem:[%s1167 + $0x18] sm:$0xff]
    %v1172 = vld [vmem:[%s1167 + $0x20] sm:$0xff]
    %v1173 = vld [vmem:[%s1167 + $0x28] sm:$0xff]
    %v1174 = vld [vmem:[%s1167 + $0x30] sm:$0xff]
    %v1175 = vld [vmem:[%s1167 + $0x38] sm:$0xff]
    %v1177 = vsel %vm608, %v1165, 0
    %v1180 = vsel %vm608, %v1166, 0
    %1182 = vmatpush.msra.mxu0 0.0
    %1183 = vmatpush.msra.mxu0 0.0
    %1184 = vmatpush.msra.mxu0 0.0
    %1185 = vmatpush.msra.mxu0 0.0
    %1186 = vmatpush.msra.mxu0 0.0
    %1187 = vmatpush.msra.mxu0 0.0
    %1188 = vmatpush.msra.mxu0 0.0
    %1189 = vmatpush.msra.mxu0 0.0
    %1190 = vmatpush.msra.mxu0 %v1175
    %1191 = vmatpush.msra.mxu0 %v1174
    %1192 = vmatpush.msra.mxu0 %v1173
    %1193 = vmatpush.msra.mxu0 %v1172
    %1194 = vmatpush.msra.mxu0 %v1171
    %1195 = vmatpush.msra.mxu0 %v1170
    %1196 = vmatpush.msra.mxu0 %v1169
    %1197 = vmatpush.msra.mxu0 %v1168
    %1198 = vmatmul.f32.gmra.mxu0 %v1177
    %v1199 = vpop.f32.mrf.mxu0
    %v1200 = vadd.f32 0.0, %v1199
    %1201 = vmatmul.f32.gmra.mxu0 %v1180
    %v1202 = vpop.f32.mrf.mxu0
    %v1203 = vadd.f32 0.0, %v1202
    %1204 = vdwg.mxu0
    %v1205 = vadd.f32 %v1108, %v1200
    %v1206 = vadd.f32 %v1109, %v1203
    %s1207 = scalar_lea.vmem %s13, 1
    %v1208 = vld [vmem:[%s1207] sm:$0x1]
    %v1210 = vperm.slane %v1208, 0
    %v1212 = vadd.f32 %v1205, %v1210
    %v1213 = vadd.f32 %v1206, %v1210
    %s1214 = scalar_lea.vmem %s14, 1
    %v1215 = vld [vmem:[%s1214] sm:$0x1]
    %s1216 = scalar_lea.vmem %s15, 1
    %v1217 = vld [vmem:[%s1216] sm:$0x1]
    %v1218 = vsel %vm75, %v1212, 0.0
    %1219 = vadd.xlane.f32.xlu0 %v1218
    %v1220 = vpop.xlane.xlu0 %1219
    %v1221 = vsel %vm75, %v1213, 0.0
    %1222 = vadd.xlane.f32.xlu0 %v1221
    %v1223 = vpop.xlane.xlu0 %1222
    %v1224 = vmul.f32 %v1220, %v88
    %v1225 = vmul.f32 %v1223, %v88
    %v1226 = vsub.f32 %v1212, %v1224
    %v1227 = vsub.f32 %v1213, %v1225
    %v1228 = vmul.f32 %v1226, %v1226
    %v1229 = vmul.f32 %v1227, %v1227
    %v1230 = vsel %vm75, %v1228, 0.0
    %1231 = vadd.xlane.f32.xlu0 %v1230
    %v1232 = vpop.xlane.xlu0 %1231
    %v1233 = vsel %vm75, %v1229, 0.0
    %1234 = vadd.xlane.f32.xlu0 %v1233
    %v1235 = vpop.xlane.xlu0 %1234
    %v1236 = vmul.f32 %v1232, %v88
    %v1237 = vmul.f32 %v1235, %v88
    %v1238 = vadd.f32 %v1236, 1e-12
    %v1239 = vadd.f32 %v1237, 1e-12
    %v1240 = vrsqrt.pop %v1238
    %v1241 = vmul.f32 %v1240, %v1238
    %v1242 = vmul.f32 %v1241, %v1240
    %v1243 = vmul.f32 0.5, %v1242
    %v1244 = vsub.f32 1.5, %v1243
    %v1245 = vmul.f32 %v1240, %v1244
    %vm1246 = vweird.f32 %v1238
    %vm1247 = vweird.f32 %v1240
    %vm1248 = vmor %vm1246, %vm1247
    %v1249 = vsel %vm1248, %v1240, %v1245
    %v1250 = vrsqrt.pop %v1239
    %v1251 = vmul.f32 %v1250, %v1239
    %v1252 = vmul.f32 %v1251, %v1250
    %v1253 = vmul.f32 0.5, %v1252
    %v1254 = vsub.f32 1.5, %v1253
    %v1255 = vmul.f32 %v1250, %v1254
    %vm1256 = vweird.f32 %v1239
    %vm1257 = vweird.f32 %v1250
    %vm1258 = vmor %vm1256, %vm1257
    %v1259 = vsel %vm1258, %v1250, %v1255
    %v1260 = vmul.f32 %v1226, %v1249
    %v1261 = vmul.f32 %v1227, %v1259
    %v1263 = vperm.slane %v1215, 0
    %v1265 = vmul.f32 %v1260, %v1263
    %v1266 = vmul.f32 %v1261, %v1263
    %v1268 = vperm.slane %v1217, 0
    %v1270 = vadd.f32 %v1265, %v1268
    %v1271 = vadd.f32 %v1266, %v1268
    %v1273 = vrot.slane %v1271, 7
    %vm1275 = vcmask 1040384
    %v1276 = vsel %vm1275, %v1270, %v1273
    %v1277 = vld [vmem:[%s16] sm:$0xff]
    %v1278 = vld [vmem:[%s16 + $0x8] sm:$0xff]
    %v1279 = vld [vmem:[%s16 + $0x10] sm:$0xff]
    %v1280 = vld [vmem:[%s16 + $0x18] sm:$0xff]
    %v1281 = vld [vmem:[%s17] sm:$0x1]
    %v1283 = vperm.slane %v1281, 0
    %v1286 = vsel %vm75, %v1276, 0
    %1288 = vmatpush.msra.mxu0 0.0
    %1289 = vmatpush.msra.mxu0 0.0
    %1290 = vmatpush.msra.mxu0 0.0
    %1291 = vmatpush.msra.mxu0 0.0
    %1292 = vmatpush.msra.mxu0 0.0
    %1293 = vmatpush.msra.mxu0 0.0
    %1294 = vmatpush.msra.mxu0 0.0
    %1295 = vmatpush.msra.mxu0 0.0
    %1296 = vmatpush.msra.mxu0 0.0
    %1297 = vmatpush.msra.mxu0 0.0
    %1298 = vmatpush.msra.mxu0 0.0
    %1299 = vmatpush.msra.mxu0 0.0
    %1300 = vmatpush.msra.mxu0 %v1280
    %1301 = vmatpush.msra.mxu0 %v1279
    %1302 = vmatpush.msra.mxu0 %v1278
    %1303 = vmatpush.msra.mxu0 %v1277
    %1304 = vmatmul.f32.gmra.mxu0 %v1286
    %v1305 = vpop.f32.mrf.mxu0
    %v1306 = vadd.f32 %v1283, %v1305
    %1307 = vdwg.mxu0
    %v1308 = vtanh.pop %v1306
    %v1309 = vld [vmem:[%s18] sm:$0xff]
    %v1310 = vld [vmem:[%s18 + $0x8] sm:$0xff]
    %v1311 = vld [vmem:[%s18 + $0x10] sm:$0xff]
    %v1312 = vld [vmem:[%s18 + $0x18] sm:$0xff]
    %v1313 = vld [vmem:[%s19] sm:$0x1]
    %v1315 = vperm.slane %v1313, 0
    %v1318 = vsel %vm75, %v1308, 0
    %1320 = vmatpush.msra.mxu0 0.0
    %1321 = vmatpush.msra.mxu0 0.0
    %1322 = vmatpush.msra.mxu0 0.0
    %1323 = vmatpush.msra.mxu0 0.0
    %1324 = vmatpush.msra.mxu0 0.0
    %1325 = vmatpush.msra.mxu0 0.0
    %1326 = vmatpush.msra.mxu0 0.0
    %1327 = vmatpush.msra.mxu0 0.0
    %1328 = vmatpush.msra.mxu0 0.0
    %1329 = vmatpush.msra.mxu0 0.0
    %1330 = vmatpush.msra.mxu0 0.0
    %1331 = vmatpush.msra.mxu0 0.0
    %1332 = vmatpush.msra.mxu0 %v1312
    %1333 = vmatpush.msra.mxu0 %v1311
    %1334 = vmatpush.msra.mxu0 %v1310
    %1335 = vmatpush.msra.mxu0 %v1309
    %1336 = vmatmul.f32.gmra.mxu0 %v1318
    %v1337 = vpop.f32.mrf.mxu0
    %v1338 = vadd.f32 %v1315, %v1337
    %1339 = vdwg.mxu0
    %1340 = vst [vmem:[#allocation2] sm:$0x3] %v1338
    // Predicated region
    $region82: #{bert_sentiment_forward.1} parent=1 // pred_check
      _
    $region83: #{bert_sentiment_forward.1} parent=1 // pred_check_branch
      %1342 = sbr.rel (0) target = $region85
    $region84: #{bert_sentiment_forward.1} parent=1 // pred_region
      %1344 = vsyncadd [#allocation3], 0
      %s1346 = sshll.u32 [#allocation2], 4
      %s1347 = int_to_ptr.vmem [resolvable:$true] %s1346
      %s1348 = sshll.u32 %s20, 4
      %s1349 = int_to_ptr.hbm [resolvable:$true] %s1348
      %1351 = dma.vmem_to_hbm [thread:$0]  %s1347, 32, %s1349, [#allocation3]
    $region85: #{bert_sentiment_forward.1} parent=1 // pred_fallthru
      _
    // Predicated region
    $region86: #{bert_sentiment_forward.1} parent=1 // pred_check
      _
    $region87: #{bert_sentiment_forward.1} parent=1 // pred_check_branch
      %1353 = sbr.rel (0) target = $region89
    $region88: #{bert_sentiment_forward.1} parent=1 // pred_region
      %1355 = dma.done [#allocation3], 32
    $region89: #{bert_sentiment_forward.1} parent=1 // pred_fallthru
      _
    %1356 = vsyncpa [#allocation3], 1

</llo_original>
